<compile_context>
chip_gen: v5e
topology: v5e:2x2
jax: 0.10.0
libtpu: 0.0.40
codegen_flags: <defaults>
</compile_context>

<pallas_src>
import functools
import numpy as np

import jax
import jax.numpy as jnp
from jax.experimental import pallas as pl
from jax.experimental.pallas import tpu as pltpu


# ----------------------------- kernel body ---------------------------------

def brusselator_kernel(x_ref, o_ref, *, n_steps, dt, inv_dx2, H, W):
    # x_ref / o_ref blocks: (1, 2, Bg, H*W) -- channel-major, flat row-major
    # spatial layout (lane-dense: H*W is a multiple of 128).
    HW = H * W
    Bg = x_ref.shape[2]
    half_dt = 0.5 * dt

    # Loop-invariant lane masks (hoisted out of the time loop).
    lane = jax.lax.broadcasted_iota(jnp.int32, (Bg, HW), 1)   # flat index h*W + w
    w_idx = lane % W
    is_w_first = w_idx == 0
    is_w_last = w_idx == (W - 1)

    def laplacian(z):
        # z: (Bg, HW). Periodic 5-point stencil via flat lane rolls.
        # All roll shifts are non-negative and < HW.
        north = pltpu.roll(z, W, 1)                      # z[h-1, w] (H-wrap via mod HW)
        south = pltpu.roll(z, HW - W, 1)                 # z[h+1, w]
        west = jnp.where(is_w_first,
                         pltpu.roll(z, HW - W + 1, 1),   # wrap: z[h, W-1]
                         pltpu.roll(z, 1, 1))            # z[h, w-1]
        east = jnp.where(is_w_last,
                         pltpu.roll(z, W - 1, 1),        # wrap: z[h, 0]
                         pltpu.roll(z, HW - 1, 1))       # z[h, w+1]
        return north + south + west + east - 4.0 * z

    def rhs(u, v):
        a = (u * u) * v                                  # u^2 * v
        du = inv_dx2 * laplacian(u) + 3.0 - 7.0 * u + a
        dv = (5.0 * inv_dx2) * laplacian(v) + 6.0 * u - a
        return du, dv

    def rk2_step(_, carry):
        u, v = carry
        du1, dv1 = rhs(u, v)
        du2, dv2 = rhs(u + dt * du1, v + dt * dv1)
        return (u + half_dt * (du1 + du2), v + half_dt * (dv1 + dv2))

    u0 = x_ref[0, 0]                                     # (Bg, HW)
    v0 = x_ref[0, 1]                                     # (Bg, HW)
    uN, vN = jax.lax.fori_loop(0, n_steps, rk2_step, (u0, v0),
                               unroll=min(n_steps, 4))
    o_ref[0, 0] = uN
    o_ref[0, 1] = vN


# ----------------------------- wrapper --------------------------------------

def _tensorcores_per_chip():
    """Best-effort count of TensorCores per chip (v7x has 2; v5e/v6e have 1)."""
    try:
        info = pltpu.get_tpu_info()
        for name in ("tensorcores_per_chip", "num_tensorcores"):
            val = getattr(info, name, None)
            if isinstance(val, int) and val > 0:
                return val
    except Exception:
        pass
    try:
        kind = jax.devices()[0].device_kind.lower()
        if "v7" in kind:
            return 2
    except Exception:
        pass
    return 1


def brusselator_forward(inputs, T, *, max_dt, dx):
    """Equivalent of Brusselator.forward(inputs, T) == predict(inputs, T).

    inputs: (B, 2, H, W) float32, channel 0 = u, channel 1 = v.
    """
    B, C, H, W = inputs.shape
    assert C == 2
    N = max(int(np.ceil(float(T) / float(max_dt))), 1)
    dt = float(T) / N
    HW = H * W

    # Batch-group split: one group per TensorCore on multi-TC chips (v7x);
    # a single merged block on single-TC chips (v5e/v6e) so each roll / VPU op
    # services the entire batch at once.
    n_tc = _tensorcores_per_chip()
    G = n_tc if (n_tc > 1 and B >= n_tc and B % n_tc == 0) else 1
    Bg = B // G

    # Layout: (G, C, Bg, H*W) -- channel-major per group, lane-dense flat spatial.
    x = inputs.reshape(G, Bg, C, HW).transpose(0, 2, 1, 3)

    kernel = functools.partial(
        brusselator_kernel,
        n_steps=N, dt=dt, inv_dx2=1.0 / float(dx) ** 2, H=H, W=W,
    )

    out = pl.pallas_call(
        kernel,
        out_shape=jax.ShapeDtypeStruct((G, C, Bg, HW), inputs.dtype),
        grid_spec=pl.GridSpec(
            grid=(G,),
            in_specs=[pl.BlockSpec((1, C, Bg, HW), lambda g: (g, 0, 0, 0))],
            out_specs=pl.BlockSpec((1, C, Bg, HW), lambda g: (g, 0, 0, 0)),
        ),
        compiler_params=pltpu.CompilerParams(
            dimension_semantics=("parallel",),
        ),
    )(x)
    return out.transpose(0, 2, 1, 3).reshape(B, C, H, W)


# ------------------------- pure-JAX reference --------------------------------

def _rhs_ref(u, dx):
    inv_dx2 = 1.0 / dx ** 2
    lap = inv_dx2 * (
        jnp.roll(u, 1, axis=-2) + jnp.roll(u, -1, axis=-2)
        + jnp.roll(u, 1, axis=-1) + jnp.roll(u, -1, axis=-1)
        - 4.0 * u
    )
    uu = u[..., :1, :, :]
    vv = u[..., 1:, :, :]
    A = uu ** 2
    rhs_u = lap[..., :1, :, :] + 3.0 - 7.0 * uu + A * vv
    rhs_v = 5.0 * lap[..., 1:, :, :] + 6.0 * uu - A * vv
    return jnp.concatenate([rhs_u, rhs_v], axis=-3)


def _forward_ref(u, T, *, max_dt, dx):
    N = max(int(np.ceil(T / max_dt)), 1)
    dt = T / N
    for _ in range(N):
        k1 = _rhs_ref(u, dx)
        k2 = _rhs_ref(u + dt * k1, dx)
        u = u + (dt / 2.0) * (k1 + k2)
    return u


# ------------------------------- main ----------------------------------------

if __name__ == "__main__":
    # Module constructor values (consistent with __init__ defaults).
    mesh_size = (16, 16)
    mesh_bound = np.array(((-5.0, -5.0), (5.0, 5.0)))
    dx0, dx1 = (mesh_bound[1] - mesh_bound[0]) / np.array(mesh_size)
    assert abs(dx0 - dx1) < 1e-10
    dx = float(dx0)          # 0.625
    max_dt = 0.05
    T = 0.2                  # -> 4 fused RK2 steps

    B, C, H, W = 2, 2, mesh_size[0], mesh_size[1]
    key = jax.random.PRNGKey(0)
    inputs = 0.5 + 0.1 * jax.random.normal(key, (B, C, H, W), dtype=jnp.float32)

    out = brusselator_forward(inputs, T, max_dt=max_dt, dx=dx)
    out = jax.block_until_ready(out)

    ref = _forward_ref(inputs, T, max_dt=max_dt, dx=dx)
    np.testing.assert_allclose(np.asarray(out), np.asarray(ref), rtol=1e-5, atol=1e-5)

    print("KERNEL_OK")
</pallas_src>

<mosaic_0001>
module attributes {stable_mosaic.version = 11 : i64} {
  func.func @brusselator_kernel(%arg0: i32, %arg1: memref<1x2x2x256xf32, #tpu.memory_space<vmem>>, %arg2: memref<1x2x2x256xf32, #tpu.memory_space<vmem>>) attributes {dimension_semantics = [#tpu.dimension_semantics<parallel>], iteration_bounds = array<i64: 1>, scalar_prefetch = 0 : i64, scratch_operands = 0 : i64, tpu.core_type = #tpu.core_type<tc>, window_params = [{transform_indices = @transform_0, window_bounds = array<i64: 1, 2, 2, 256>}, {transform_indices = @transform_1, window_bounds = array<i64: 1, 2, 2, 256>}]} {
    %0 = tpu.iota {dimensions = array<i32: 1>} : vector<2x256xi32>
    %c16_i32 = arith.constant 16 : i32
    %c0_i32 = arith.constant 0 : i32
    %1 = arith.cmpi eq, %c16_i32, %c0_i32 : i32
    %c1_i32 = arith.constant 1 : i32
    %2 = arith.select %1, %c1_i32, %c16_i32 : i32
    %3 = vector.broadcast %2 : i32 to vector<2x256xi32>
    %4 = arith.remsi %0, %3 : vector<2x256xi32>
    %c0_i32_0 = arith.constant 0 : i32
    %5 = vector.broadcast %c0_i32_0 : i32 to vector<2x256xi32>
    %6 = arith.cmpi ne, %4, %5 : vector<2x256xi32>
    %c0_i32_1 = arith.constant 0 : i32
    %7 = vector.broadcast %c0_i32_1 : i32 to vector<2x256xi32>
    %8 = arith.cmpi slt, %4, %7 : vector<2x256xi32>
    %c0_i32_2 = arith.constant 0 : i32
    %9 = arith.cmpi slt, %2, %c0_i32_2 : i32
    %10 = vector.broadcast %9 : i1 to vector<2x256xi1>
    %11 = vector.broadcast %10 : vector<2x256xi1> to vector<2x256xi1>
    %12 = arith.xori %8, %11 : vector<2x256xi1>
    %13 = arith.andi %12, %6 : vector<2x256xi1>
    %14 = vector.broadcast %2 : i32 to vector<2x256xi32>
    %15 = arith.addi %4, %14 : vector<2x256xi32>
    %16 = arith.select %13, %15, %4 : vector<2x256xi1>, vector<2x256xi32>
    %c0_i32_3 = arith.constant 0 : i32
    %17 = vector.broadcast %c0_i32_3 : i32 to vector<2x256xi32>
    %18 = arith.cmpi eq, %16, %17 : vector<2x256xi32>
    %c15_i32 = arith.constant 15 : i32
    %19 = vector.broadcast %c15_i32 : i32 to vector<2x256xi32>
    %20 = arith.cmpi eq, %16, %19 : vector<2x256xi32>
    %c0 = arith.constant 0 : index
    %c0_4 = arith.constant 0 : index
    %c0_5 = arith.constant 0 : index
    %c0_6 = arith.constant 0 : index
    %21 = vector.load %arg1[%c0, %c0_4, %c0_5, %c0_6] : memref<1x2x2x256xf32, #tpu.memory_space<vmem>>, vector<1x1x2x256xf32>
    %22 = vector.shape_cast %21 : vector<1x1x2x256xf32> to vector<2x256xf32>
    %c0_7 = arith.constant 0 : index
    %c1 = arith.constant 1 : index
    %c0_8 = arith.constant 0 : index
    %c0_9 = arith.constant 0 : index
    %23 = vector.load %arg1[%c0_7, %c1, %c0_8, %c0_9] : memref<1x2x2x256xf32, #tpu.memory_space<vmem>>, vector<1x1x2x256xf32>
    %24 = vector.shape_cast %23 : vector<1x1x2x256xf32> to vector<2x256xf32>
    %c0_i32_10 = arith.constant 0 : i32
    %25 = arith.mulf %22, %22 : vector<2x256xf32>
    %26 = arith.mulf %25, %24 : vector<2x256xf32>
    %c16_i32_11 = arith.constant 16 : i32
    %27 = tpu.dynamic_rotate %22 by %c16_i32_11 dim 1 : vector<2x256xf32>, i32 -> vector<2x256xf32>
    %c240_i32 = arith.constant 240 : i32
    %28 = tpu.dynamic_rotate %22 by %c240_i32 dim 1 : vector<2x256xf32>, i32 -> vector<2x256xf32>
    %c241_i32 = arith.constant 241 : i32
    %29 = tpu.dynamic_rotate %22 by %c241_i32 dim 1 : vector<2x256xf32>, i32 -> vector<2x256xf32>
    %c1_i32_12 = arith.constant 1 : i32
    %30 = tpu.dynamic_rotate %22 by %c1_i32_12 dim 1 : vector<2x256xf32>, i32 -> vector<2x256xf32>
    %31 = arith.select %18, %29, %30 : vector<2x256xi1>, vector<2x256xf32>
    %c15_i32_13 = arith.constant 15 : i32
    %32 = tpu.dynamic_rotate %22 by %c15_i32_13 dim 1 : vector<2x256xf32>, i32 -> vector<2x256xf32>
    %c255_i32 = arith.constant 255 : i32
    %33 = tpu.dynamic_rotate %22 by %c255_i32 dim 1 : vector<2x256xf32>, i32 -> vector<2x256xf32>
    %34 = arith.select %20, %32, %33 : vector<2x256xi1>, vector<2x256xf32>
    %35 = arith.addf %27, %28 : vector<2x256xf32>
    %36 = arith.addf %35, %31 : vector<2x256xf32>
    %37 = arith.addf %36, %34 : vector<2x256xf32>
    %cst = arith.constant 4.000000e+00 : f32
    %38 = vector.broadcast %cst : f32 to vector<2x256xf32>
    %39 = arith.mulf %38, %22 : vector<2x256xf32>
    %40 = arith.subf %37, %39 : vector<2x256xf32>
    %cst_14 = arith.constant 2.560000e+00 : f32
    %41 = vector.broadcast %cst_14 : f32 to vector<2x256xf32>
    %42 = arith.mulf %41, %40 : vector<2x256xf32>
    %cst_15 = arith.constant 3.000000e+00 : f32
    %43 = vector.broadcast %cst_15 : f32 to vector<2x256xf32>
    %44 = arith.addf %42, %43 : vector<2x256xf32>
    %cst_16 = arith.constant 7.000000e+00 : f32
    %45 = vector.broadcast %cst_16 : f32 to vector<2x256xf32>
    %46 = arith.mulf %45, %22 : vector<2x256xf32>
    %47 = arith.subf %44, %46 : vector<2x256xf32>
    %48 = arith.addf %47, %26 : vector<2x256xf32>
    %c16_i32_17 = arith.constant 16 : i32
    %49 = tpu.dynamic_rotate %24 by %c16_i32_17 dim 1 : vector<2x256xf32>, i32 -> vector<2x256xf32>
    %c240_i32_18 = arith.constant 240 : i32
    %50 = tpu.dynamic_rotate %24 by %c240_i32_18 dim 1 : vector<2x256xf32>, i32 -> vector<2x256xf32>
    %c241_i32_19 = arith.constant 241 : i32
    %51 = tpu.dynamic_rotate %24 by %c241_i32_19 dim 1 : vector<2x256xf32>, i32 -> vector<2x256xf32>
    %c1_i32_20 = arith.constant 1 : i32
    %52 = tpu.dynamic_rotate %24 by %c1_i32_20 dim 1 : vector<2x256xf32>, i32 -> vector<2x256xf32>
    %53 = arith.select %18, %51, %52 : vector<2x256xi1>, vector<2x256xf32>
    %c15_i32_21 = arith.constant 15 : i32
    %54 = tpu.dynamic_rotate %24 by %c15_i32_21 dim 1 : vector<2x256xf32>, i32 -> vector<2x256xf32>
    %c255_i32_22 = arith.constant 255 : i32
    %55 = tpu.dynamic_rotate %24 by %c255_i32_22 dim 1 : vector<2x256xf32>, i32 -> vector<2x256xf32>
    %56 = arith.select %20, %54, %55 : vector<2x256xi1>, vector<2x256xf32>
    %57 = arith.addf %49, %50 : vector<2x256xf32>
    %58 = arith.addf %57, %53 : vector<2x256xf32>
    %59 = arith.addf %58, %56 : vector<2x256xf32>
    %cst_23 = arith.constant 4.000000e+00 : f32
    %60 = vector.broadcast %cst_23 : f32 to vector<2x256xf32>
    %61 = arith.mulf %60, %24 : vector<2x256xf32>
    %62 = arith.subf %59, %61 : vector<2x256xf32>
    %cst_24 = arith.constant 1.280000e+01 : f32
    %63 = vector.broadcast %cst_24 : f32 to vector<2x256xf32>
    %64 = arith.mulf %63, %62 : vector<2x256xf32>
    %cst_25 = arith.constant 6.000000e+00 : f32
    %65 = vector.broadcast %cst_25 : f32 to vector<2x256xf32>
    %66 = arith.mulf %65, %22 : vector<2x256xf32>
    %67 = arith.addf %64, %66 : vector<2x256xf32>
    %68 = arith.subf %67, %26 : vector<2x256xf32>
    %cst_26 = arith.constant 5.000000e-02 : f32
    %69 = vector.broadcast %cst_26 : f32 to vector<2x256xf32>
    %70 = arith.mulf %69, %48 : vector<2x256xf32>
    %71 = arith.addf %22, %70 : vector<2x256xf32>
    %cst_27 = arith.constant 5.000000e-02 : f32
    %72 = vector.broadcast %cst_27 : f32 to vector<2x256xf32>
    %73 = arith.mulf %72, %68 : vector<2x256xf32>
    %74 = arith.addf %24, %73 : vector<2x256xf32>
    %75 = arith.mulf %71, %71 : vector<2x256xf32>
    %76 = arith.mulf %75, %74 : vector<2x256xf32>
    %c16_i32_28 = arith.constant 16 : i32
    %77 = tpu.dynamic_rotate %71 by %c16_i32_28 dim 1 : vector<2x256xf32>, i32 -> vector<2x256xf32>
    %c240_i32_29 = arith.constant 240 : i32
    %78 = tpu.dynamic_rotate %71 by %c240_i32_29 dim 1 : vector<2x256xf32>, i32 -> vector<2x256xf32>
    %c241_i32_30 = arith.constant 241 : i32
    %79 = tpu.dynamic_rotate %71 by %c241_i32_30 dim 1 : vector<2x256xf32>, i32 -> vector<2x256xf32>
    %c1_i32_31 = arith.constant 1 : i32
    %80 = tpu.dynamic_rotate %71 by %c1_i32_31 dim 1 : vector<2x256xf32>, i32 -> vector<2x256xf32>
    %81 = arith.select %18, %79, %80 : vector<2x256xi1>, vector<2x256xf32>
    %c15_i32_32 = arith.constant 15 : i32
    %82 = tpu.dynamic_rotate %71 by %c15_i32_32 dim 1 : vector<2x256xf32>, i32 -> vector<2x256xf32>
    %c255_i32_33 = arith.constant 255 : i32
    %83 = tpu.dynamic_rotate %71 by %c255_i32_33 dim 1 : vector<2x256xf32>, i32 -> vector<2x256xf32>
    %84 = arith.select %20, %82, %83 : vector<2x256xi1>, vector<2x256xf32>
    %85 = arith.addf %77, %78 : vector<2x256xf32>
    %86 = arith.addf %85, %81 : vector<2x256xf32>
    %87 = arith.addf %86, %84 : vector<2x256xf32>
    %cst_34 = arith.constant 4.000000e+00 : f32
    %88 = vector.broadcast %cst_34 : f32 to vector<2x256xf32>
    %89 = arith.mulf %88, %71 : vector<2x256xf32>
    %90 = arith.subf %87, %89 : vector<2x256xf32>
    %cst_35 = arith.constant 2.560000e+00 : f32
    %91 = vector.broadcast %cst_35 : f32 to vector<2x256xf32>
    %92 = arith.mulf %91, %90 : vector<2x256xf32>
    %cst_36 = arith.constant 3.000000e+00 : f32
    %93 = vector.broadcast %cst_36 : f32 to vector<2x256xf32>
    %94 = arith.addf %92, %93 : vector<2x256xf32>
    %cst_37 = arith.constant 7.000000e+00 : f32
    %95 = vector.broadcast %cst_37 : f32 to vector<2x256xf32>
    %96 = arith.mulf %95, %71 : vector<2x256xf32>
    %97 = arith.subf %94, %96 : vector<2x256xf32>
    %98 = arith.addf %97, %76 : vector<2x256xf32>
    %c16_i32_38 = arith.constant 16 : i32
    %99 = tpu.dynamic_rotate %74 by %c16_i32_38 dim 1 : vector<2x256xf32>, i32 -> vector<2x256xf32>
    %c240_i32_39 = arith.constant 240 : i32
    %100 = tpu.dynamic_rotate %74 by %c240_i32_39 dim 1 : vector<2x256xf32>, i32 -> vector<2x256xf32>
    %c241_i32_40 = arith.constant 241 : i32
    %101 = tpu.dynamic_rotate %74 by %c241_i32_40 dim 1 : vector<2x256xf32>, i32 -> vector<2x256xf32>
    %c1_i32_41 = arith.constant 1 : i32
    %102 = tpu.dynamic_rotate %74 by %c1_i32_41 dim 1 : vector<2x256xf32>, i32 -> vector<2x256xf32>
    %103 = arith.select %18, %101, %102 : vector<2x256xi1>, vector<2x256xf32>
    %c15_i32_42 = arith.constant 15 : i32
    %104 = tpu.dynamic_rotate %74 by %c15_i32_42 dim 1 : vector<2x256xf32>, i32 -> vector<2x256xf32>
    %c255_i32_43 = arith.constant 255 : i32
    %105 = tpu.dynamic_rotate %74 by %c255_i32_43 dim 1 : vector<2x256xf32>, i32 -> vector<2x256xf32>
    %106 = arith.select %20, %104, %105 : vector<2x256xi1>, vector<2x256xf32>
    %107 = arith.addf %99, %100 : vector<2x256xf32>
    %108 = arith.addf %107, %103 : vector<2x256xf32>
    %109 = arith.addf %108, %106 : vector<2x256xf32>
    %cst_44 = arith.constant 4.000000e+00 : f32
    %110 = vector.broadcast %cst_44 : f32 to vector<2x256xf32>
    %111 = arith.mulf %110, %74 : vector<2x256xf32>
    %112 = arith.subf %109, %111 : vector<2x256xf32>
    %cst_45 = arith.constant 1.280000e+01 : f32
    %113 = vector.broadcast %cst_45 : f32 to vector<2x256xf32>
    %114 = arith.mulf %113, %112 : vector<2x256xf32>
    %cst_46 = arith.constant 6.000000e+00 : f32
    %115 = vector.broadcast %cst_46 : f32 to vector<2x256xf32>
    %116 = arith.mulf %115, %71 : vector<2x256xf32>
    %117 = arith.addf %114, %116 : vector<2x256xf32>
    %118 = arith.subf %117, %76 : vector<2x256xf32>
    %119 = arith.addf %48, %98 : vector<2x256xf32>
    %cst_47 = arith.constant 2.500000e-02 : f32
    %120 = vector.broadcast %cst_47 : f32 to vector<2x256xf32>
    %121 = arith.mulf %120, %119 : vector<2x256xf32>
    %122 = arith.addf %22, %121 : vector<2x256xf32>
    %123 = arith.addf %68, %118 : vector<2x256xf32>
    %cst_48 = arith.constant 2.500000e-02 : f32
    %124 = vector.broadcast %cst_48 : f32 to vector<2x256xf32>
    %125 = arith.mulf %124, %123 : vector<2x256xf32>
    %126 = arith.addf %24, %125 : vector<2x256xf32>
    %c1_i32_49 = arith.constant 1 : i32
    %127 = arith.mulf %122, %122 : vector<2x256xf32>
    %128 = arith.mulf %127, %126 : vector<2x256xf32>
    %c16_i32_50 = arith.constant 16 : i32
    %129 = tpu.dynamic_rotate %122 by %c16_i32_50 dim 1 : vector<2x256xf32>, i32 -> vector<2x256xf32>
    %c240_i32_51 = arith.constant 240 : i32
    %130 = tpu.dynamic_rotate %122 by %c240_i32_51 dim 1 : vector<2x256xf32>, i32 -> vector<2x256xf32>
    %c241_i32_52 = arith.constant 241 : i32
    %131 = tpu.dynamic_rotate %122 by %c241_i32_52 dim 1 : vector<2x256xf32>, i32 -> vector<2x256xf32>
    %c1_i32_53 = arith.constant 1 : i32
    %132 = tpu.dynamic_rotate %122 by %c1_i32_53 dim 1 : vector<2x256xf32>, i32 -> vector<2x256xf32>
    %133 = arith.select %18, %131, %132 : vector<2x256xi1>, vector<2x256xf32>
    %c15_i32_54 = arith.constant 15 : i32
    %134 = tpu.dynamic_rotate %122 by %c15_i32_54 dim 1 : vector<2x256xf32>, i32 -> vector<2x256xf32>
    %c255_i32_55 = arith.constant 255 : i32
    %135 = tpu.dynamic_rotate %122 by %c255_i32_55 dim 1 : vector<2x256xf32>, i32 -> vector<2x256xf32>
    %136 = arith.select %20, %134, %135 : vector<2x256xi1>, vector<2x256xf32>
    %137 = arith.addf %129, %130 : vector<2x256xf32>
    %138 = arith.addf %137, %133 : vector<2x256xf32>
    %139 = arith.addf %138, %136 : vector<2x256xf32>
    %cst_56 = arith.constant 4.000000e+00 : f32
    %140 = vector.broadcast %cst_56 : f32 to vector<2x256xf32>
    %141 = arith.mulf %140, %122 : vector<2x256xf32>
    %142 = arith.subf %139, %141 : vector<2x256xf32>
    %cst_57 = arith.constant 2.560000e+00 : f32
    %143 = vector.broadcast %cst_57 : f32 to vector<2x256xf32>
    %144 = arith.mulf %143, %142 : vector<2x256xf32>
    %cst_58 = arith.constant 3.000000e+00 : f32
    %145 = vector.broadcast %cst_58 : f32 to vector<2x256xf32>
    %146 = arith.addf %144, %145 : vector<2x256xf32>
    %cst_59 = arith.constant 7.000000e+00 : f32
    %147 = vector.broadcast %cst_59 : f32 to vector<2x256xf32>
    %148 = arith.mulf %147, %122 : vector<2x256xf32>
    %149 = arith.subf %146, %148 : vector<2x256xf32>
    %150 = arith.addf %149, %128 : vector<2x256xf32>
    %c16_i32_60 = arith.constant 16 : i32
    %151 = tpu.dynamic_rotate %126 by %c16_i32_60 dim 1 : vector<2x256xf32>, i32 -> vector<2x256xf32>
    %c240_i32_61 = arith.constant 240 : i32
    %152 = tpu.dynamic_rotate %126 by %c240_i32_61 dim 1 : vector<2x256xf32>, i32 -> vector<2x256xf32>
    %c241_i32_62 = arith.constant 241 : i32
    %153 = tpu.dynamic_rotate %126 by %c241_i32_62 dim 1 : vector<2x256xf32>, i32 -> vector<2x256xf32>
    %c1_i32_63 = arith.constant 1 : i32
    %154 = tpu.dynamic_rotate %126 by %c1_i32_63 dim 1 : vector<2x256xf32>, i32 -> vector<2x256xf32>
    %155 = arith.select %18, %153, %154 : vector<2x256xi1>, vector<2x256xf32>
    %c15_i32_64 = arith.constant 15 : i32
    %156 = tpu.dynamic_rotate %126 by %c15_i32_64 dim 1 : vector<2x256xf32>, i32 -> vector<2x256xf32>
    %c255_i32_65 = arith.constant 255 : i32
    %157 = tpu.dynamic_rotate %126 by %c255_i32_65 dim 1 : vector<2x256xf32>, i32 -> vector<2x256xf32>
    %158 = arith.select %20, %156, %157 : vector<2x256xi1>, vector<2x256xf32>
    %159 = arith.addf %151, %152 : vector<2x256xf32>
    %160 = arith.addf %159, %155 : vector<2x256xf32>
    %161 = arith.addf %160, %158 : vector<2x256xf32>
    %cst_66 = arith.constant 4.000000e+00 : f32
    %162 = vector.broadcast %cst_66 : f32 to vector<2x256xf32>
    %163 = arith.mulf %162, %126 : vector<2x256xf32>
    %164 = arith.subf %161, %163 : vector<2x256xf32>
    %cst_67 = arith.constant 1.280000e+01 : f32
    %165 = vector.broadcast %cst_67 : f32 to vector<2x256xf32>
    %166 = arith.mulf %165, %164 : vector<2x256xf32>
    %cst_68 = arith.constant 6.000000e+00 : f32
    %167 = vector.broadcast %cst_68 : f32 to vector<2x256xf32>
    %168 = arith.mulf %167, %122 : vector<2x256xf32>
    %169 = arith.addf %166, %168 : vector<2x256xf32>
    %170 = arith.subf %169, %128 : vector<2x256xf32>
    %cst_69 = arith.constant 5.000000e-02 : f32
    %171 = vector.broadcast %cst_69 : f32 to vector<2x256xf32>
    %172 = arith.mulf %171, %150 : vector<2x256xf32>
    %173 = arith.addf %122, %172 : vector<2x256xf32>
    %cst_70 = arith.constant 5.000000e-02 : f32
    %174 = vector.broadcast %cst_70 : f32 to vector<2x256xf32>
    %175 = arith.mulf %174, %170 : vector<2x256xf32>
    %176 = arith.addf %126, %175 : vector<2x256xf32>
    %177 = arith.mulf %173, %173 : vector<2x256xf32>
    %178 = arith.mulf %177, %176 : vector<2x256xf32>
    %c16_i32_71 = arith.constant 16 : i32
    %179 = tpu.dynamic_rotate %173 by %c16_i32_71 dim 1 : vector<2x256xf32>, i32 -> vector<2x256xf32>
    %c240_i32_72 = arith.constant 240 : i32
    %180 = tpu.dynamic_rotate %173 by %c240_i32_72 dim 1 : vector<2x256xf32>, i32 -> vector<2x256xf32>
    %c241_i32_73 = arith.constant 241 : i32
    %181 = tpu.dynamic_rotate %173 by %c241_i32_73 dim 1 : vector<2x256xf32>, i32 -> vector<2x256xf32>
    %c1_i32_74 = arith.constant 1 : i32
    %182 = tpu.dynamic_rotate %173 by %c1_i32_74 dim 1 : vector<2x256xf32>, i32 -> vector<2x256xf32>
    %183 = arith.select %18, %181, %182 : vector<2x256xi1>, vector<2x256xf32>
    %c15_i32_75 = arith.constant 15 : i32
    %184 = tpu.dynamic_rotate %173 by %c15_i32_75 dim 1 : vector<2x256xf32>, i32 -> vector<2x256xf32>
    %c255_i32_76 = arith.constant 255 : i32
    %185 = tpu.dynamic_rotate %173 by %c255_i32_76 dim 1 : vector<2x256xf32>, i32 -> vector<2x256xf32>
    %186 = arith.select %20, %184, %185 : vector<2x256xi1>, vector<2x256xf32>
    %187 = arith.addf %179, %180 : vector<2x256xf32>
    %188 = arith.addf %187, %183 : vector<2x256xf32>
    %189 = arith.addf %188, %186 : vector<2x256xf32>
    %cst_77 = arith.constant 4.000000e+00 : f32
    %190 = vector.broadcast %cst_77 : f32 to vector<2x256xf32>
    %191 = arith.mulf %190, %173 : vector<2x256xf32>
    %192 = arith.subf %189, %191 : vector<2x256xf32>
    %cst_78 = arith.constant 2.560000e+00 : f32
    %193 = vector.broadcast %cst_78 : f32 to vector<2x256xf32>
    %194 = arith.mulf %193, %192 : vector<2x256xf32>
    %cst_79 = arith.constant 3.000000e+00 : f32
    %195 = vector.broadcast %cst_79 : f32 to vector<2x256xf32>
    %196 = arith.addf %194, %195 : vector<2x256xf32>
    %cst_80 = arith.constant 7.000000e+00 : f32
    %197 = vector.broadcast %cst_80 : f32 to vector<2x256xf32>
    %198 = arith.mulf %197, %173 : vector<2x256xf32>
    %199 = arith.subf %196, %198 : vector<2x256xf32>
    %200 = arith.addf %199, %178 : vector<2x256xf32>
    %c16_i32_81 = arith.constant 16 : i32
    %201 = tpu.dynamic_rotate %176 by %c16_i32_81 dim 1 : vector<2x256xf32>, i32 -> vector<2x256xf32>
    %c240_i32_82 = arith.constant 240 : i32
    %202 = tpu.dynamic_rotate %176 by %c240_i32_82 dim 1 : vector<2x256xf32>, i32 -> vector<2x256xf32>
    %c241_i32_83 = arith.constant 241 : i32
    %203 = tpu.dynamic_rotate %176 by %c241_i32_83 dim 1 : vector<2x256xf32>, i32 -> vector<2x256xf32>
    %c1_i32_84 = arith.constant 1 : i32
    %204 = tpu.dynamic_rotate %176 by %c1_i32_84 dim 1 : vector<2x256xf32>, i32 -> vector<2x256xf32>
    %205 = arith.select %18, %203, %204 : vector<2x256xi1>, vector<2x256xf32>
    %c15_i32_85 = arith.constant 15 : i32
    %206 = tpu.dynamic_rotate %176 by %c15_i32_85 dim 1 : vector<2x256xf32>, i32 -> vector<2x256xf32>
    %c255_i32_86 = arith.constant 255 : i32
    %207 = tpu.dynamic_rotate %176 by %c255_i32_86 dim 1 : vector<2x256xf32>, i32 -> vector<2x256xf32>
    %208 = arith.select %20, %206, %207 : vector<2x256xi1>, vector<2x256xf32>
    %209 = arith.addf %201, %202 : vector<2x256xf32>
    %210 = arith.addf %209, %205 : vector<2x256xf32>
    %211 = arith.addf %210, %208 : vector<2x256xf32>
    %cst_87 = arith.constant 4.000000e+00 : f32
    %212 = vector.broadcast %cst_87 : f32 to vector<2x256xf32>
    %213 = arith.mulf %212, %176 : vector<2x256xf32>
    %214 = arith.subf %211, %213 : vector<2x256xf32>
    %cst_88 = arith.constant 1.280000e+01 : f32
    %215 = vector.broadcast %cst_88 : f32 to vector<2x256xf32>
    %216 = arith.mulf %215, %214 : vector<2x256xf32>
    %cst_89 = arith.constant 6.000000e+00 : f32
    %217 = vector.broadcast %cst_89 : f32 to vector<2x256xf32>
    %218 = arith.mulf %217, %173 : vector<2x256xf32>
    %219 = arith.addf %216, %218 : vector<2x256xf32>
    %220 = arith.subf %219, %178 : vector<2x256xf32>
    %221 = arith.addf %150, %200 : vector<2x256xf32>
    %cst_90 = arith.constant 2.500000e-02 : f32
    %222 = vector.broadcast %cst_90 : f32 to vector<2x256xf32>
    %223 = arith.mulf %222, %221 : vector<2x256xf32>
    %224 = arith.addf %122, %223 : vector<2x256xf32>
    %225 = arith.addf %170, %220 : vector<2x256xf32>
    %cst_91 = arith.constant 2.500000e-02 : f32
    %226 = vector.broadcast %cst_91 : f32 to vector<2x256xf32>
    %227 = arith.mulf %226, %225 : vector<2x256xf32>
    %228 = arith.addf %126, %227 : vector<2x256xf32>
    %c2_i32 = arith.constant 2 : i32
    %229 = arith.mulf %224, %224 : vector<2x256xf32>
    %230 = arith.mulf %229, %228 : vector<2x256xf32>
    %c16_i32_92 = arith.constant 16 : i32
    %231 = tpu.dynamic_rotate %224 by %c16_i32_92 dim 1 : vector<2x256xf32>, i32 -> vector<2x256xf32>
    %c240_i32_93 = arith.constant 240 : i32
    %232 = tpu.dynamic_rotate %224 by %c240_i32_93 dim 1 : vector<2x256xf32>, i32 -> vector<2x256xf32>
    %c241_i32_94 = arith.constant 241 : i32
    %233 = tpu.dynamic_rotate %224 by %c241_i32_94 dim 1 : vector<2x256xf32>, i32 -> vector<2x256xf32>
    %c1_i32_95 = arith.constant 1 : i32
    %234 = tpu.dynamic_rotate %224 by %c1_i32_95 dim 1 : vector<2x256xf32>, i32 -> vector<2x256xf32>
    %235 = arith.select %18, %233, %234 : vector<2x256xi1>, vector<2x256xf32>
    %c15_i32_96 = arith.constant 15 : i32
    %236 = tpu.dynamic_rotate %224 by %c15_i32_96 dim 1 : vector<2x256xf32>, i32 -> vector<2x256xf32>
    %c255_i32_97 = arith.constant 255 : i32
    %237 = tpu.dynamic_rotate %224 by %c255_i32_97 dim 1 : vector<2x256xf32>, i32 -> vector<2x256xf32>
    %238 = arith.select %20, %236, %237 : vector<2x256xi1>, vector<2x256xf32>
    %239 = arith.addf %231, %232 : vector<2x256xf32>
    %240 = arith.addf %239, %235 : vector<2x256xf32>
    %241 = arith.addf %240, %238 : vector<2x256xf32>
    %cst_98 = arith.constant 4.000000e+00 : f32
    %242 = vector.broadcast %cst_98 : f32 to vector<2x256xf32>
    %243 = arith.mulf %242, %224 : vector<2x256xf32>
    %244 = arith.subf %241, %243 : vector<2x256xf32>
    %cst_99 = arith.constant 2.560000e+00 : f32
    %245 = vector.broadcast %cst_99 : f32 to vector<2x256xf32>
    %246 = arith.mulf %245, %244 : vector<2x256xf32>
    %cst_100 = arith.constant 3.000000e+00 : f32
    %247 = vector.broadcast %cst_100 : f32 to vector<2x256xf32>
    %248 = arith.addf %246, %247 : vector<2x256xf32>
    %cst_101 = arith.constant 7.000000e+00 : f32
    %249 = vector.broadcast %cst_101 : f32 to vector<2x256xf32>
    %250 = arith.mulf %249, %224 : vector<2x256xf32>
    %251 = arith.subf %248, %250 : vector<2x256xf32>
    %252 = arith.addf %251, %230 : vector<2x256xf32>
    %c16_i32_102 = arith.constant 16 : i32
    %253 = tpu.dynamic_rotate %228 by %c16_i32_102 dim 1 : vector<2x256xf32>, i32 -> vector<2x256xf32>
    %c240_i32_103 = arith.constant 240 : i32
    %254 = tpu.dynamic_rotate %228 by %c240_i32_103 dim 1 : vector<2x256xf32>, i32 -> vector<2x256xf32>
    %c241_i32_104 = arith.constant 241 : i32
    %255 = tpu.dynamic_rotate %228 by %c241_i32_104 dim 1 : vector<2x256xf32>, i32 -> vector<2x256xf32>
    %c1_i32_105 = arith.constant 1 : i32
    %256 = tpu.dynamic_rotate %228 by %c1_i32_105 dim 1 : vector<2x256xf32>, i32 -> vector<2x256xf32>
    %257 = arith.select %18, %255, %256 : vector<2x256xi1>, vector<2x256xf32>
    %c15_i32_106 = arith.constant 15 : i32
    %258 = tpu.dynamic_rotate %228 by %c15_i32_106 dim 1 : vector<2x256xf32>, i32 -> vector<2x256xf32>
    %c255_i32_107 = arith.constant 255 : i32
    %259 = tpu.dynamic_rotate %228 by %c255_i32_107 dim 1 : vector<2x256xf32>, i32 -> vector<2x256xf32>
    %260 = arith.select %20, %258, %259 : vector<2x256xi1>, vector<2x256xf32>
    %261 = arith.addf %253, %254 : vector<2x256xf32>
    %262 = arith.addf %261, %257 : vector<2x256xf32>
    %263 = arith.addf %262, %260 : vector<2x256xf32>
    %cst_108 = arith.constant 4.000000e+00 : f32
    %264 = vector.broadcast %cst_108 : f32 to vector<2x256xf32>
    %265 = arith.mulf %264, %228 : vector<2x256xf32>
    %266 = arith.subf %263, %265 : vector<2x256xf32>
    %cst_109 = arith.constant 1.280000e+01 : f32
    %267 = vector.broadcast %cst_109 : f32 to vector<2x256xf32>
    %268 = arith.mulf %267, %266 : vector<2x256xf32>
    %cst_110 = arith.constant 6.000000e+00 : f32
    %269 = vector.broadcast %cst_110 : f32 to vector<2x256xf32>
    %270 = arith.mulf %269, %224 : vector<2x256xf32>
    %271 = arith.addf %268, %270 : vector<2x256xf32>
    %272 = arith.subf %271, %230 : vector<2x256xf32>
    %cst_111 = arith.constant 5.000000e-02 : f32
    %273 = vector.broadcast %cst_111 : f32 to vector<2x256xf32>
    %274 = arith.mulf %273, %252 : vector<2x256xf32>
    %275 = arith.addf %224, %274 : vector<2x256xf32>
    %cst_112 = arith.constant 5.000000e-02 : f32
    %276 = vector.broadcast %cst_112 : f32 to vector<2x256xf32>
    %277 = arith.mulf %276, %272 : vector<2x256xf32>
    %278 = arith.addf %228, %277 : vector<2x256xf32>
    %279 = arith.mulf %275, %275 : vector<2x256xf32>
    %280 = arith.mulf %279, %278 : vector<2x256xf32>
    %c16_i32_113 = arith.constant 16 : i32
    %281 = tpu.dynamic_rotate %275 by %c16_i32_113 dim 1 : vector<2x256xf32>, i32 -> vector<2x256xf32>
    %c240_i32_114 = arith.constant 240 : i32
    %282 = tpu.dynamic_rotate %275 by %c240_i32_114 dim 1 : vector<2x256xf32>, i32 -> vector<2x256xf32>
    %c241_i32_115 = arith.constant 241 : i32
    %283 = tpu.dynamic_rotate %275 by %c241_i32_115 dim 1 : vector<2x256xf32>, i32 -> vector<2x256xf32>
    %c1_i32_116 = arith.constant 1 : i32
    %284 = tpu.dynamic_rotate %275 by %c1_i32_116 dim 1 : vector<2x256xf32>, i32 -> vector<2x256xf32>
    %285 = arith.select %18, %283, %284 : vector<2x256xi1>, vector<2x256xf32>
    %c15_i32_117 = arith.constant 15 : i32
    %286 = tpu.dynamic_rotate %275 by %c15_i32_117 dim 1 : vector<2x256xf32>, i32 -> vector<2x256xf32>
    %c255_i32_118 = arith.constant 255 : i32
    %287 = tpu.dynamic_rotate %275 by %c255_i32_118 dim 1 : vector<2x256xf32>, i32 -> vector<2x256xf32>
    %288 = arith.select %20, %286, %287 : vector<2x256xi1>, vector<2x256xf32>
    %289 = arith.addf %281, %282 : vector<2x256xf32>
    %290 = arith.addf %289, %285 : vector<2x256xf32>
    %291 = arith.addf %290, %288 : vector<2x256xf32>
    %cst_119 = arith.constant 4.000000e+00 : f32
    %292 = vector.broadcast %cst_119 : f32 to vector<2x256xf32>
    %293 = arith.mulf %292, %275 : vector<2x256xf32>
    %294 = arith.subf %291, %293 : vector<2x256xf32>
    %cst_120 = arith.constant 2.560000e+00 : f32
    %295 = vector.broadcast %cst_120 : f32 to vector<2x256xf32>
    %296 = arith.mulf %295, %294 : vector<2x256xf32>
    %cst_121 = arith.constant 3.000000e+00 : f32
    %297 = vector.broadcast %cst_121 : f32 to vector<2x256xf32>
    %298 = arith.addf %296, %297 : vector<2x256xf32>
    %cst_122 = arith.constant 7.000000e+00 : f32
    %299 = vector.broadcast %cst_122 : f32 to vector<2x256xf32>
    %300 = arith.mulf %299, %275 : vector<2x256xf32>
    %301 = arith.subf %298, %300 : vector<2x256xf32>
    %302 = arith.addf %301, %280 : vector<2x256xf32>
    %c16_i32_123 = arith.constant 16 : i32
    %303 = tpu.dynamic_rotate %278 by %c16_i32_123 dim 1 : vector<2x256xf32>, i32 -> vector<2x256xf32>
    %c240_i32_124 = arith.constant 240 : i32
    %304 = tpu.dynamic_rotate %278 by %c240_i32_124 dim 1 : vector<2x256xf32>, i32 -> vector<2x256xf32>
    %c241_i32_125 = arith.constant 241 : i32
    %305 = tpu.dynamic_rotate %278 by %c241_i32_125 dim 1 : vector<2x256xf32>, i32 -> vector<2x256xf32>
    %c1_i32_126 = arith.constant 1 : i32
    %306 = tpu.dynamic_rotate %278 by %c1_i32_126 dim 1 : vector<2x256xf32>, i32 -> vector<2x256xf32>
    %307 = arith.select %18, %305, %306 : vector<2x256xi1>, vector<2x256xf32>
    %c15_i32_127 = arith.constant 15 : i32
    %308 = tpu.dynamic_rotate %278 by %c15_i32_127 dim 1 : vector<2x256xf32>, i32 -> vector<2x256xf32>
    %c255_i32_128 = arith.constant 255 : i32
    %309 = tpu.dynamic_rotate %278 by %c255_i32_128 dim 1 : vector<2x256xf32>, i32 -> vector<2x256xf32>
    %310 = arith.select %20, %308, %309 : vector<2x256xi1>, vector<2x256xf32>
    %311 = arith.addf %303, %304 : vector<2x256xf32>
    %312 = arith.addf %311, %307 : vector<2x256xf32>
    %313 = arith.addf %312, %310 : vector<2x256xf32>
    %cst_129 = arith.constant 4.000000e+00 : f32
    %314 = vector.broadcast %cst_129 : f32 to vector<2x256xf32>
    %315 = arith.mulf %314, %278 : vector<2x256xf32>
    %316 = arith.subf %313, %315 : vector<2x256xf32>
    %cst_130 = arith.constant 1.280000e+01 : f32
    %317 = vector.broadcast %cst_130 : f32 to vector<2x256xf32>
    %318 = arith.mulf %317, %316 : vector<2x256xf32>
    %cst_131 = arith.constant 6.000000e+00 : f32
    %319 = vector.broadcast %cst_131 : f32 to vector<2x256xf32>
    %320 = arith.mulf %319, %275 : vector<2x256xf32>
    %321 = arith.addf %318, %320 : vector<2x256xf32>
    %322 = arith.subf %321, %280 : vector<2x256xf32>
    %323 = arith.addf %252, %302 : vector<2x256xf32>
    %cst_132 = arith.constant 2.500000e-02 : f32
    %324 = vector.broadcast %cst_132 : f32 to vector<2x256xf32>
    %325 = arith.mulf %324, %323 : vector<2x256xf32>
    %326 = arith.addf %224, %325 : vector<2x256xf32>
    %327 = arith.addf %272, %322 : vector<2x256xf32>
    %cst_133 = arith.constant 2.500000e-02 : f32
    %328 = vector.broadcast %cst_133 : f32 to vector<2x256xf32>
    %329 = arith.mulf %328, %327 : vector<2x256xf32>
    %330 = arith.addf %228, %329 : vector<2x256xf32>
    %c3_i32 = arith.constant 3 : i32
    %331 = arith.mulf %326, %326 : vector<2x256xf32>
    %332 = arith.mulf %331, %330 : vector<2x256xf32>
    %c16_i32_134 = arith.constant 16 : i32
    %333 = tpu.dynamic_rotate %326 by %c16_i32_134 dim 1 : vector<2x256xf32>, i32 -> vector<2x256xf32>
    %c240_i32_135 = arith.constant 240 : i32
    %334 = tpu.dynamic_rotate %326 by %c240_i32_135 dim 1 : vector<2x256xf32>, i32 -> vector<2x256xf32>
    %c241_i32_136 = arith.constant 241 : i32
    %335 = tpu.dynamic_rotate %326 by %c241_i32_136 dim 1 : vector<2x256xf32>, i32 -> vector<2x256xf32>
    %c1_i32_137 = arith.constant 1 : i32
    %336 = tpu.dynamic_rotate %326 by %c1_i32_137 dim 1 : vector<2x256xf32>, i32 -> vector<2x256xf32>
    %337 = arith.select %18, %335, %336 : vector<2x256xi1>, vector<2x256xf32>
    %c15_i32_138 = arith.constant 15 : i32
    %338 = tpu.dynamic_rotate %326 by %c15_i32_138 dim 1 : vector<2x256xf32>, i32 -> vector<2x256xf32>
    %c255_i32_139 = arith.constant 255 : i32
    %339 = tpu.dynamic_rotate %326 by %c255_i32_139 dim 1 : vector<2x256xf32>, i32 -> vector<2x256xf32>
    %340 = arith.select %20, %338, %339 : vector<2x256xi1>, vector<2x256xf32>
    %341 = arith.addf %333, %334 : vector<2x256xf32>
    %342 = arith.addf %341, %337 : vector<2x256xf32>
    %343 = arith.addf %342, %340 : vector<2x256xf32>
    %cst_140 = arith.constant 4.000000e+00 : f32
    %344 = vector.broadcast %cst_140 : f32 to vector<2x256xf32>
    %345 = arith.mulf %344, %326 : vector<2x256xf32>
    %346 = arith.subf %343, %345 : vector<2x256xf32>
    %cst_141 = arith.constant 2.560000e+00 : f32
    %347 = vector.broadcast %cst_141 : f32 to vector<2x256xf32>
    %348 = arith.mulf %347, %346 : vector<2x256xf32>
    %cst_142 = arith.constant 3.000000e+00 : f32
    %349 = vector.broadcast %cst_142 : f32 to vector<2x256xf32>
    %350 = arith.addf %348, %349 : vector<2x256xf32>
    %cst_143 = arith.constant 7.000000e+00 : f32
    %351 = vector.broadcast %cst_143 : f32 to vector<2x256xf32>
    %352 = arith.mulf %351, %326 : vector<2x256xf32>
    %353 = arith.subf %350, %352 : vector<2x256xf32>
    %354 = arith.addf %353, %332 : vector<2x256xf32>
    %c16_i32_144 = arith.constant 16 : i32
    %355 = tpu.dynamic_rotate %330 by %c16_i32_144 dim 1 : vector<2x256xf32>, i32 -> vector<2x256xf32>
    %c240_i32_145 = arith.constant 240 : i32
    %356 = tpu.dynamic_rotate %330 by %c240_i32_145 dim 1 : vector<2x256xf32>, i32 -> vector<2x256xf32>
    %c241_i32_146 = arith.constant 241 : i32
    %357 = tpu.dynamic_rotate %330 by %c241_i32_146 dim 1 : vector<2x256xf32>, i32 -> vector<2x256xf32>
    %c1_i32_147 = arith.constant 1 : i32
    %358 = tpu.dynamic_rotate %330 by %c1_i32_147 dim 1 : vector<2x256xf32>, i32 -> vector<2x256xf32>
    %359 = arith.select %18, %357, %358 : vector<2x256xi1>, vector<2x256xf32>
    %c15_i32_148 = arith.constant 15 : i32
    %360 = tpu.dynamic_rotate %330 by %c15_i32_148 dim 1 : vector<2x256xf32>, i32 -> vector<2x256xf32>
    %c255_i32_149 = arith.constant 255 : i32
    %361 = tpu.dynamic_rotate %330 by %c255_i32_149 dim 1 : vector<2x256xf32>, i32 -> vector<2x256xf32>
    %362 = arith.select %20, %360, %361 : vector<2x256xi1>, vector<2x256xf32>
    %363 = arith.addf %355, %356 : vector<2x256xf32>
    %364 = arith.addf %363, %359 : vector<2x256xf32>
    %365 = arith.addf %364, %362 : vector<2x256xf32>
    %cst_150 = arith.constant 4.000000e+00 : f32
    %366 = vector.broadcast %cst_150 : f32 to vector<2x256xf32>
    %367 = arith.mulf %366, %330 : vector<2x256xf32>
    %368 = arith.subf %365, %367 : vector<2x256xf32>
    %cst_151 = arith.constant 1.280000e+01 : f32
    %369 = vector.broadcast %cst_151 : f32 to vector<2x256xf32>
    %370 = arith.mulf %369, %368 : vector<2x256xf32>
    %cst_152 = arith.constant 6.000000e+00 : f32
    %371 = vector.broadcast %cst_152 : f32 to vector<2x256xf32>
    %372 = arith.mulf %371, %326 : vector<2x256xf32>
    %373 = arith.addf %370, %372 : vector<2x256xf32>
    %374 = arith.subf %373, %332 : vector<2x256xf32>
    %cst_153 = arith.constant 5.000000e-02 : f32
    %375 = vector.broadcast %cst_153 : f32 to vector<2x256xf32>
    %376 = arith.mulf %375, %354 : vector<2x256xf32>
    %377 = arith.addf %326, %376 : vector<2x256xf32>
    %cst_154 = arith.constant 5.000000e-02 : f32
    %378 = vector.broadcast %cst_154 : f32 to vector<2x256xf32>
    %379 = arith.mulf %378, %374 : vector<2x256xf32>
    %380 = arith.addf %330, %379 : vector<2x256xf32>
    %381 = arith.mulf %377, %377 : vector<2x256xf32>
    %382 = arith.mulf %381, %380 : vector<2x256xf32>
    %c16_i32_155 = arith.constant 16 : i32
    %383 = tpu.dynamic_rotate %377 by %c16_i32_155 dim 1 : vector<2x256xf32>, i32 -> vector<2x256xf32>
    %c240_i32_156 = arith.constant 240 : i32
    %384 = tpu.dynamic_rotate %377 by %c240_i32_156 dim 1 : vector<2x256xf32>, i32 -> vector<2x256xf32>
    %c241_i32_157 = arith.constant 241 : i32
    %385 = tpu.dynamic_rotate %377 by %c241_i32_157 dim 1 : vector<2x256xf32>, i32 -> vector<2x256xf32>
    %c1_i32_158 = arith.constant 1 : i32
    %386 = tpu.dynamic_rotate %377 by %c1_i32_158 dim 1 : vector<2x256xf32>, i32 -> vector<2x256xf32>
    %387 = arith.select %18, %385, %386 : vector<2x256xi1>, vector<2x256xf32>
    %c15_i32_159 = arith.constant 15 : i32
    %388 = tpu.dynamic_rotate %377 by %c15_i32_159 dim 1 : vector<2x256xf32>, i32 -> vector<2x256xf32>
    %c255_i32_160 = arith.constant 255 : i32
    %389 = tpu.dynamic_rotate %377 by %c255_i32_160 dim 1 : vector<2x256xf32>, i32 -> vector<2x256xf32>
    %390 = arith.select %20, %388, %389 : vector<2x256xi1>, vector<2x256xf32>
    %391 = arith.addf %383, %384 : vector<2x256xf32>
    %392 = arith.addf %391, %387 : vector<2x256xf32>
    %393 = arith.addf %392, %390 : vector<2x256xf32>
    %cst_161 = arith.constant 4.000000e+00 : f32
    %394 = vector.broadcast %cst_161 : f32 to vector<2x256xf32>
    %395 = arith.mulf %394, %377 : vector<2x256xf32>
    %396 = arith.subf %393, %395 : vector<2x256xf32>
    %cst_162 = arith.constant 2.560000e+00 : f32
    %397 = vector.broadcast %cst_162 : f32 to vector<2x256xf32>
    %398 = arith.mulf %397, %396 : vector<2x256xf32>
    %cst_163 = arith.constant 3.000000e+00 : f32
    %399 = vector.broadcast %cst_163 : f32 to vector<2x256xf32>
    %400 = arith.addf %398, %399 : vector<2x256xf32>
    %cst_164 = arith.constant 7.000000e+00 : f32
    %401 = vector.broadcast %cst_164 : f32 to vector<2x256xf32>
    %402 = arith.mulf %401, %377 : vector<2x256xf32>
    %403 = arith.subf %400, %402 : vector<2x256xf32>
    %404 = arith.addf %403, %382 : vector<2x256xf32>
    %c16_i32_165 = arith.constant 16 : i32
    %405 = tpu.dynamic_rotate %380 by %c16_i32_165 dim 1 : vector<2x256xf32>, i32 -> vector<2x256xf32>
    %c240_i32_166 = arith.constant 240 : i32
    %406 = tpu.dynamic_rotate %380 by %c240_i32_166 dim 1 : vector<2x256xf32>, i32 -> vector<2x256xf32>
    %c241_i32_167 = arith.constant 241 : i32
    %407 = tpu.dynamic_rotate %380 by %c241_i32_167 dim 1 : vector<2x256xf32>, i32 -> vector<2x256xf32>
    %c1_i32_168 = arith.constant 1 : i32
    %408 = tpu.dynamic_rotate %380 by %c1_i32_168 dim 1 : vector<2x256xf32>, i32 -> vector<2x256xf32>
    %409 = arith.select %18, %407, %408 : vector<2x256xi1>, vector<2x256xf32>
    %c15_i32_169 = arith.constant 15 : i32
    %410 = tpu.dynamic_rotate %380 by %c15_i32_169 dim 1 : vector<2x256xf32>, i32 -> vector<2x256xf32>
    %c255_i32_170 = arith.constant 255 : i32
    %411 = tpu.dynamic_rotate %380 by %c255_i32_170 dim 1 : vector<2x256xf32>, i32 -> vector<2x256xf32>
    %412 = arith.select %20, %410, %411 : vector<2x256xi1>, vector<2x256xf32>
    %413 = arith.addf %405, %406 : vector<2x256xf32>
    %414 = arith.addf %413, %409 : vector<2x256xf32>
    %415 = arith.addf %414, %412 : vector<2x256xf32>
    %cst_171 = arith.constant 4.000000e+00 : f32
    %416 = vector.broadcast %cst_171 : f32 to vector<2x256xf32>
    %417 = arith.mulf %416, %380 : vector<2x256xf32>
    %418 = arith.subf %415, %417 : vector<2x256xf32>
    %cst_172 = arith.constant 1.280000e+01 : f32
    %419 = vector.broadcast %cst_172 : f32 to vector<2x256xf32>
    %420 = arith.mulf %419, %418 : vector<2x256xf32>
    %cst_173 = arith.constant 6.000000e+00 : f32
    %421 = vector.broadcast %cst_173 : f32 to vector<2x256xf32>
    %422 = arith.mulf %421, %377 : vector<2x256xf32>
    %423 = arith.addf %420, %422 : vector<2x256xf32>
    %424 = arith.subf %423, %382 : vector<2x256xf32>
    %425 = arith.addf %354, %404 : vector<2x256xf32>
    %cst_174 = arith.constant 2.500000e-02 : f32
    %426 = vector.broadcast %cst_174 : f32 to vector<2x256xf32>
    %427 = arith.mulf %426, %425 : vector<2x256xf32>
    %428 = arith.addf %326, %427 : vector<2x256xf32>
    %429 = arith.addf %374, %424 : vector<2x256xf32>
    %cst_175 = arith.constant 2.500000e-02 : f32
    %430 = vector.broadcast %cst_175 : f32 to vector<2x256xf32>
    %431 = arith.mulf %430, %429 : vector<2x256xf32>
    %432 = arith.addf %330, %431 : vector<2x256xf32>
    %c0_176 = arith.constant 0 : index
    %c0_177 = arith.constant 0 : index
    %c0_178 = arith.constant 0 : index
    %c0_179 = arith.constant 0 : index
    %433 = vector.load %arg2[%c0_176, %c0_177, %c0_178, %c0_179] : memref<1x2x2x256xf32, #tpu.memory_space<vmem>>, vector<1x1x2x256xf32>
    %434 = vector.shape_cast %433 : vector<1x1x2x256xf32> to vector<2x256xf32>
    %435 = vector.shape_cast %428 : vector<2x256xf32> to vector<1x1x2x256xf32>
    tpu.vector_store %arg2[%c0_176, %c0_177, %c0_178, %c0_179], %435 {strides = array<i32>} : memref<1x2x2x256xf32, #tpu.memory_space<vmem>>, vector<1x1x2x256xf32>,
    %c0_180 = arith.constant 0 : index
    %c1_181 = arith.constant 1 : index
    %c0_182 = arith.constant 0 : index
    %c0_183 = arith.constant 0 : index
    %436 = vector.load %arg2[%c0_180, %c1_181, %c0_182, %c0_183] : memref<1x2x2x256xf32, #tpu.memory_space<vmem>>, vector<1x1x2x256xf32>
    %437 = vector.shape_cast %436 : vector<1x1x2x256xf32> to vector<2x256xf32>
    %438 = vector.shape_cast %432 : vector<2x256xf32> to vector<1x1x2x256xf32>
    tpu.vector_store %arg2[%c0_180, %c1_181, %c0_182, %c0_183], %438 {strides = array<i32>} : memref<1x2x2x256xf32, #tpu.memory_space<vmem>>, vector<1x1x2x256xf32>,
    return
  }
  func.func @transform_0(%arg0: i32) -> (i32, i32, i32, i32) {
    %c0_i32 = arith.constant 0 : i32
    %c0_i32_0 = arith.constant 0 : i32
    %c0_i32_1 = arith.constant 0 : i32
    %c0_i32_2 = arith.constant 0 : i32
    return %arg0, %c0_i32, %c0_i32_0, %c0_i32_1 : i32, i32, i32, i32
  }
  func.func @transform_1(%arg0: i32) -> (i32, i32, i32, i32) {
    %c0_i32 = arith.constant 0 : i32
    %c0_i32_0 = arith.constant 0 : i32
    %c0_i32_1 = arith.constant 0 : i32
    %c0_i32_2 = arith.constant 0 : i32
    return %arg0, %c0_i32, %c0_i32_0, %c0_i32_1 : i32, i32, i32, i32
  }
}

</mosaic_0001>

<llo_original>
// kernel: tpu_custom_call.1
$region0: #{tpu_custom_call.1}
  #allocation0 [shape = 'u32[]', space=smem, size = 0x4, offset = 0x4, fixed_abs, tag = 'smem constant byte address 0x4 - core index']
  #allocation1 [shape = 'u32[72,128]{1,0:T(1,128)}', space=vmem, size = 0x9000, scoped, tag = 'internal scratch']
  %s0 = inlined_call_operand.hbm [shape: f32[1,2,2,256], index: 0, kind: input, shape index: {}]
  %s1 = inlined_call_operand.hbm [shape: f32[1,2,2,256], index: 1, kind: output, shape index: {}]
  %s2 = sld [smem:[#allocation0]]
  $region18: #{tpu_custom_call.1} parent=0
    _
  %s4 = ssub.s32 1, %s2
  %s5 = scalar_select 0, %s4, %s2
  $region1: #{tpu_custom_call.1} parent=0
    #allocation2 [shape = 'u8[4096]{0}', space=vmem, size = 0x1000, scoped, tag = 'input window, operand 0, single buffered']
    #allocation3 [shape = 's32[1]{0}', space=sflag, size = 0x4, scoped, tag = 'scoped memory for tpu_custom_call.1']
    #allocation4 [shape = 's32[1]{0}', space=sflag, size = 0x4, scoped, tag = 'scoped memory for tpu_custom_call.1']
    #allocation5 [shape = 'u8[4096]{0}', space=vmem, size = 0x1000, scoped, tag = 'output window, operand 0, single buffered']
    %6 = vsyncpa [#allocation3], 0
    %7 = vsyncpa [#allocation4], 0
    // Predicated region
    $region2: #{tpu_custom_call.1} parent=1 // pred_check
      _
    $region3: #{tpu_custom_call.1} parent=1 // pred_check_branch
      %9 = sbr.rel (0) target = $region5
    $region4: #{tpu_custom_call.1} parent=1 // pred_region
      %11 = vsyncadd [#allocation3], 0
      %s12 = sshll.u32 %s0, 4
      %s13 = int_to_ptr.hbm [resolvable:$true] %s12
      %s14 = sshll.u32 [#allocation2], 4
      %s15 = int_to_ptr.vmem [resolvable:$true] %s14
      %20 = dma.hbm_to_vmem [thread:$0]  %s13, 128, %s15, [#allocation3], 64, 64, 4
    $region5: #{tpu_custom_call.1} parent=1 // pred_fallthru
      _
    // Predicated region
    $region6: #{tpu_custom_call.1} parent=1 // pred_check
      _
    $region7: #{tpu_custom_call.1} parent=1 // pred_check_branch
      %22 = sbr.rel (0) target = $region9
    $region8: #{tpu_custom_call.1} parent=1 // pred_region
      %24 = dma.done [#allocation3], 128
    $region9: #{tpu_custom_call.1} parent=1 // pred_fallthru
      _
    %v25 = vlaneseq
    %v26 = vand.u32 %v25, 127
    %v27 = vadd.s32 %v26, 128
    %vm28 = vcmp.lt.s32.totalorder %v26, 0
    %v29 = vsub.s32 0, %v26
    %v30 = vsel %vm28, %v29, %v26
    %v31 = vshrl.u32 %v30, 4
    %v32 = vand.u32 %v30, 15
    %v33 = vsub.s32 0, %v32
    %v34 = vsel %vm28, %v33, %v32
    %vm35 = vcmp.lt.s32.totalorder %v27, 0
    %v36 = vsub.s32 0, %v27
    %v37 = vsel %vm35, %v36, %v27
    %v38 = vshrl.u32 %v37, 4
    %v39 = vand.u32 %v37, 15
    %v40 = vsub.s32 0, %v39
    %v41 = vsel %vm35, %v40, %v39
    %vm42 = vcmp.ne.s32.totalorder %v34, 0
    %vm43 = vcmp.ne.s32.totalorder %v41, 0
    %vm44 = vcmp.lt.s32.totalorder %v34, 0
    %vm45 = vcmp.lt.s32.totalorder %v41, 0
    %vm46 = vmand %vm44, %vm42
    %vm47 = vmand %vm45, %vm43
    %v48 = vadd.s32 %v34, 16
    %v49 = vadd.s32 %v41, 16
    %v50 = vsel %vm46, %v48, %v34
    %v51 = vsel %vm47, %v49, %v41
    %vm52 = vcmp.eq.s32.totalorder %v50, 0
    %vm53 = vcmp.eq.s32.totalorder %v51, 0
    %vm54 = vcmp.eq.s32.totalorder %v50, 15
    %vm55 = vcmp.eq.s32.totalorder %v51, 15
    %v56 = vld [vmem:[#allocation2] sm:$0xf]
    %s57 = scalar_lea.vmem [#allocation2], 4
    %v58 = vld [vmem:[%s57] sm:$0xf]
    %v59 = vmul.f32 %v56, %v56
    %v60 = vmul.f32 %v59, %v58
    %62 = vst [vmem:[#allocation1] ss:$4 sm:$0xff] %v56
    %v63 = vld.sshfl [vmem:[#allocation1] sm:$0xff pattern:$0x73625140]
    %v64 = vld.sshfl [vmem:[#allocation1 + $0x8] sm:$0xff pattern:$0x73625140]
    %67 = vrot.lane.b32.xlu0 %v63, 16
    %v68 = vpop.permute.xlu0 %67
    %69 = vrot.lane.b32.xlu0 %v64, 16
    %v70 = vpop.permute.xlu0 %69
    %vm71 = vcmp.lt.s32.totalorder %v26, 16
    %v72 = vsel %vm71, %v68, %v70
    %v73 = vsel %vm71, %v70, %v68
    %74 = vst [vmem:[#allocation1] ss:$4 sm:$0xff] %v56
    %v75 = vld.sshfl [vmem:[#allocation1] sm:$0xff pattern:$0x73625140]
    %v76 = vld.sshfl [vmem:[#allocation1 + $0x8] sm:$0xff pattern:$0x73625140]
    %79 = vrot.lane.b32.xlu0 %v75, 112
    %v80 = vpop.permute.xlu0 %79
    %81 = vrot.lane.b32.xlu0 %v76, 112
    %v82 = vpop.permute.xlu0 %81
    %vm83 = vcmp.lt.s32.totalorder %v26, 112
    %v84 = vsel %vm83, %v80, %v82
    %v85 = vsel %vm83, %v82, %v80
    %86 = vst [vmem:[#allocation1] ss:$4 sm:$0xff] %v56
    %v87 = vld.sshfl [vmem:[#allocation1] sm:$0xff pattern:$0x73625140]
    %v88 = vld.sshfl [vmem:[#allocation1 + $0x8] sm:$0xff pattern:$0x73625140]
    %91 = vrot.lane.b32.xlu0 %v87, 113
    %v92 = vpop.permute.xlu0 %91
    %93 = vrot.lane.b32.xlu0 %v88, 113
    %v94 = vpop.permute.xlu0 %93
    %vm95 = vcmp.lt.s32.totalorder %v26, 113
    %v96 = vsel %vm95, %v92, %v94
    %v97 = vsel %vm95, %v94, %v92
    %98 = vst [vmem:[#allocation1] ss:$4 sm:$0xff] %v56
    %v99 = vld.sshfl [vmem:[#allocation1] sm:$0xff pattern:$0x73625140]
    %v100 = vld.sshfl [vmem:[#allocation1 + $0x8] sm:$0xff pattern:$0x73625140]
    %103 = vrot.lane.b32.xlu0 %v99, 1
    %v104 = vpop.permute.xlu0 %103
    %105 = vrot.lane.b32.xlu0 %v100, 1
    %v106 = vpop.permute.xlu0 %105
    %vm107 = vcmp.lt.s32.totalorder %v26, 1
    %v108 = vsel %vm107, %v104, %v106
    %v109 = vsel %vm107, %v106, %v104
    %v110 = vsel %vm52, %v96, %v109
    %v111 = vsel %vm53, %v97, %v108
    %112 = vst [vmem:[#allocation1] ss:$4 sm:$0xff] %v56
    %v113 = vld.sshfl [vmem:[#allocation1] sm:$0xff pattern:$0x73625140]
    %v114 = vld.sshfl [vmem:[#allocation1 + $0x8] sm:$0xff pattern:$0x73625140]
    %117 = vrot.lane.b32.xlu0 %v113, 15
    %v118 = vpop.permute.xlu0 %117
    %119 = vrot.lane.b32.xlu0 %v114, 15
    %v120 = vpop.permute.xlu0 %119
    %vm121 = vcmp.lt.s32.totalorder %v26, 15
    %v122 = vsel %vm121, %v118, %v120
    %v123 = vsel %vm121, %v120, %v118
    %124 = vst [vmem:[#allocation1] ss:$4 sm:$0xff] %v56
    %v125 = vld.sshfl [vmem:[#allocation1] sm:$0xff pattern:$0x73625140]
    %v126 = vld.sshfl [vmem:[#allocation1 + $0x8] sm:$0xff pattern:$0x73625140]
    %129 = vrot.lane.b32.xlu0 %v125, 127
    %v130 = vpop.permute.xlu0 %129
    %131 = vrot.lane.b32.xlu0 %v126, 127
    %v132 = vpop.permute.xlu0 %131
    %vm133 = vcmp.lt.s32.totalorder %v26, 127
    %v134 = vsel %vm133, %v130, %v132
    %v135 = vsel %vm133, %v132, %v130
    %v136 = vsel %vm54, %v123, %v134
    %v137 = vsel %vm55, %v122, %v135
    %v138 = vadd.f32 %v73, %v84
    %v139 = vadd.f32 %v72, %v85
    %v140 = vadd.f32 %v138, %v110
    %v141 = vadd.f32 %v139, %v111
    %v142 = vadd.f32 %v140, %v136
    %v143 = vadd.f32 %v141, %v137
    %v144 = vmul.f32 %v56, 4.0
    %146 = vst [vmem:[#allocation1] ss:$4 sm:$0xff] %v144
    %v147 = vld.sshfl [vmem:[#allocation1] sm:$0xff pattern:$0x73625140]
    %v148 = vld.sshfl [vmem:[#allocation1 + $0x8] sm:$0xff pattern:$0x73625140]
    %v151 = vsub.f32 %v142, %v147
    %v152 = vsub.f32 %v143, %v148
    %v153 = vmul.f32 %v151, 2.56
    %v154 = vmul.f32 %v152, 2.56
    %v155 = vadd.f32 %v153, 3.0
    %v156 = vadd.f32 %v154, 3.0
    %v157 = vmul.f32 %v56, 7.0
    %159 = vst [vmem:[#allocation1] ss:$4 sm:$0xff] %v157
    %v160 = vld.sshfl [vmem:[#allocation1] sm:$0xff pattern:$0x73625140]
    %v161 = vld.sshfl [vmem:[#allocation1 + $0x8] sm:$0xff pattern:$0x73625140]
    %v164 = vsub.f32 %v155, %v160
    %v165 = vsub.f32 %v156, %v161
    %167 = vst [vmem:[#allocation1] ss:$4 sm:$0xff] %v60
    %v168 = vld.sshfl [vmem:[#allocation1] sm:$0xff pattern:$0x73625140]
    %v169 = vld.sshfl [vmem:[#allocation1 + $0x8] sm:$0xff pattern:$0x73625140]
    %v172 = vadd.f32 %v164, %v168
    %v173 = vadd.f32 %v165, %v169
    %175 = vst [vmem:[#allocation1] ss:$4 sm:$0xff] %v58
    %v176 = vld.sshfl [vmem:[#allocation1] sm:$0xff pattern:$0x73625140]
    %v177 = vld.sshfl [vmem:[#allocation1 + $0x8] sm:$0xff pattern:$0x73625140]
    %180 = vrot.lane.b32.xlu0 %v176, 16
    %v181 = vpop.permute.xlu0 %180
    %182 = vrot.lane.b32.xlu0 %v177, 16
    %v183 = vpop.permute.xlu0 %182
    %v184 = vsel %vm71, %v181, %v183
    %v185 = vsel %vm71, %v183, %v181
    %186 = vst [vmem:[#allocation1] ss:$4 sm:$0xff] %v58
    %v187 = vld.sshfl [vmem:[#allocation1] sm:$0xff pattern:$0x73625140]
    %v188 = vld.sshfl [vmem:[#allocation1 + $0x8] sm:$0xff pattern:$0x73625140]
    %191 = vrot.lane.b32.xlu0 %v187, 112
    %v192 = vpop.permute.xlu0 %191
    %193 = vrot.lane.b32.xlu0 %v188, 112
    %v194 = vpop.permute.xlu0 %193
    %v195 = vsel %vm83, %v192, %v194
    %v196 = vsel %vm83, %v194, %v192
    %197 = vst [vmem:[#allocation1] ss:$4 sm:$0xff] %v58
    %v198 = vld.sshfl [vmem:[#allocation1] sm:$0xff pattern:$0x73625140]
    %v199 = vld.sshfl [vmem:[#allocation1 + $0x8] sm:$0xff pattern:$0x73625140]
    %202 = vrot.lane.b32.xlu0 %v198, 113
    %v203 = vpop.permute.xlu0 %202
    %204 = vrot.lane.b32.xlu0 %v199, 113
    %v205 = vpop.permute.xlu0 %204
    %v206 = vsel %vm95, %v203, %v205
    %v207 = vsel %vm95, %v205, %v203
    %208 = vst [vmem:[#allocation1] ss:$4 sm:$0xff] %v58
    %v209 = vld.sshfl [vmem:[#allocation1] sm:$0xff pattern:$0x73625140]
    %v210 = vld.sshfl [vmem:[#allocation1 + $0x8] sm:$0xff pattern:$0x73625140]
    %213 = vrot.lane.b32.xlu0 %v209, 1
    %v214 = vpop.permute.xlu0 %213
    %215 = vrot.lane.b32.xlu0 %v210, 1
    %v216 = vpop.permute.xlu0 %215
    %v217 = vsel %vm107, %v214, %v216
    %v218 = vsel %vm107, %v216, %v214
    %v219 = vsel %vm52, %v206, %v218
    %v220 = vsel %vm53, %v207, %v217
    %221 = vst [vmem:[#allocation1] ss:$4 sm:$0xff] %v58
    %v222 = vld.sshfl [vmem:[#allocation1] sm:$0xff pattern:$0x73625140]
    %v223 = vld.sshfl [vmem:[#allocation1 + $0x8] sm:$0xff pattern:$0x73625140]
    %226 = vrot.lane.b32.xlu0 %v222, 15
    %v227 = vpop.permute.xlu0 %226
    %228 = vrot.lane.b32.xlu0 %v223, 15
    %v229 = vpop.permute.xlu0 %228
    %v230 = vsel %vm121, %v227, %v229
    %v231 = vsel %vm121, %v229, %v227
    %232 = vst [vmem:[#allocation1] ss:$4 sm:$0xff] %v58
    %v233 = vld.sshfl [vmem:[#allocation1] sm:$0xff pattern:$0x73625140]
    %v234 = vld.sshfl [vmem:[#allocation1 + $0x8] sm:$0xff pattern:$0x73625140]
    %237 = vrot.lane.b32.xlu0 %v233, 127
    %v238 = vpop.permute.xlu0 %237
    %239 = vrot.lane.b32.xlu0 %v234, 127
    %v240 = vpop.permute.xlu0 %239
    %v241 = vsel %vm133, %v238, %v240
    %v242 = vsel %vm133, %v240, %v238
    %v243 = vsel %vm54, %v231, %v241
    %v244 = vsel %vm55, %v230, %v242
    %v245 = vadd.f32 %v185, %v195
    %v246 = vadd.f32 %v184, %v196
    %v247 = vadd.f32 %v245, %v219
    %v248 = vadd.f32 %v246, %v220
    %v249 = vadd.f32 %v247, %v243
    %v250 = vadd.f32 %v248, %v244
    %v251 = vmul.f32 %v58, 4.0
    %253 = vst [vmem:[#allocation1] ss:$4 sm:$0xff] %v251
    %v254 = vld.sshfl [vmem:[#allocation1] sm:$0xff pattern:$0x73625140]
    %v255 = vld.sshfl [vmem:[#allocation1 + $0x8] sm:$0xff pattern:$0x73625140]
    %v258 = vsub.f32 %v249, %v254
    %v259 = vsub.f32 %v250, %v255
    %v260 = vmul.f32 %v258, 12.8
    %v261 = vmul.f32 %v259, 12.8
    %v262 = vmul.f32 %v56, 6.0
    %264 = vst [vmem:[#allocation1] ss:$4 sm:$0xff] %v262
    %v265 = vld.sshfl [vmem:[#allocation1] sm:$0xff pattern:$0x73625140]
    %v266 = vld.sshfl [vmem:[#allocation1 + $0x8] sm:$0xff pattern:$0x73625140]
    %v269 = vadd.f32 %v260, %v265
    %v270 = vadd.f32 %v261, %v266
    %271 = vst [vmem:[#allocation1] ss:$4 sm:$0xff] %v60
    %v272 = vld.sshfl [vmem:[#allocation1] sm:$0xff pattern:$0x73625140]
    %v273 = vld.sshfl [vmem:[#allocation1 + $0x8] sm:$0xff pattern:$0x73625140]
    %v276 = vsub.f32 %v269, %v272
    %v277 = vsub.f32 %v270, %v273
    %v278 = vmul.f32 %v172, 0.05
    %v279 = vmul.f32 %v173, 0.05
    %v282 = vrot.slane %v279, 6
    %vm283 = vcmask 1041408
    %v284 = vsel %vm283, %v278, %v282
    %v286 = vadd.f32 %v56, %v284
    %v287 = vmul.f32 %v276, 0.05
    %v288 = vmul.f32 %v277, 0.05
    %v291 = vrot.slane %v288, 6
    %v292 = vsel %vm283, %v287, %v291
    %v294 = vadd.f32 %v58, %v292
    %v295 = vmul.f32 %v286, %v286
    %v296 = vmul.f32 %v295, %v294
    %298 = vst [vmem:[#allocation1] ss:$4 sm:$0xff] %v286
    %v299 = vld.sshfl [vmem:[#allocation1] sm:$0xff pattern:$0x73625140]
    %v300 = vld.sshfl [vmem:[#allocation1 + $0x8] sm:$0xff pattern:$0x73625140]
    %303 = vrot.lane.b32.xlu0 %v299, 16
    %v304 = vpop.permute.xlu0 %303
    %305 = vrot.lane.b32.xlu0 %v300, 16
    %v306 = vpop.permute.xlu0 %305
    %v307 = vsel %vm71, %v304, %v306
    %v308 = vsel %vm71, %v306, %v304
    %309 = vst [vmem:[#allocation1] ss:$4 sm:$0xff] %v286
    %v310 = vld.sshfl [vmem:[#allocation1] sm:$0xff pattern:$0x73625140]
    %v311 = vld.sshfl [vmem:[#allocation1 + $0x8] sm:$0xff pattern:$0x73625140]
    %314 = vrot.lane.b32.xlu0 %v310, 112
    %v315 = vpop.permute.xlu0 %314
    %316 = vrot.lane.b32.xlu0 %v311, 112
    %v317 = vpop.permute.xlu0 %316
    %v318 = vsel %vm83, %v315, %v317
    %v319 = vsel %vm83, %v317, %v315
    %320 = vst [vmem:[#allocation1] ss:$4 sm:$0xff] %v286
    %v321 = vld.sshfl [vmem:[#allocation1] sm:$0xff pattern:$0x73625140]
    %v322 = vld.sshfl [vmem:[#allocation1 + $0x8] sm:$0xff pattern:$0x73625140]
    %325 = vrot.lane.b32.xlu0 %v321, 113
    %v326 = vpop.permute.xlu0 %325
    %327 = vrot.lane.b32.xlu0 %v322, 113
    %v328 = vpop.permute.xlu0 %327
    %v329 = vsel %vm95, %v326, %v328
    %v330 = vsel %vm95, %v328, %v326
    %331 = vst [vmem:[#allocation1] ss:$4 sm:$0xff] %v286
    %v332 = vld.sshfl [vmem:[#allocation1] sm:$0xff pattern:$0x73625140]
    %v333 = vld.sshfl [vmem:[#allocation1 + $0x8] sm:$0xff pattern:$0x73625140]
    %336 = vrot.lane.b32.xlu0 %v332, 1
    %v337 = vpop.permute.xlu0 %336
    %338 = vrot.lane.b32.xlu0 %v333, 1
    %v339 = vpop.permute.xlu0 %338
    %v340 = vsel %vm107, %v337, %v339
    %v341 = vsel %vm107, %v339, %v337
    %v342 = vsel %vm52, %v329, %v341
    %v343 = vsel %vm53, %v330, %v340
    %344 = vst [vmem:[#allocation1] ss:$4 sm:$0xff] %v286
    %v345 = vld.sshfl [vmem:[#allocation1] sm:$0xff pattern:$0x73625140]
    %v346 = vld.sshfl [vmem:[#allocation1 + $0x8] sm:$0xff pattern:$0x73625140]
    %349 = vrot.lane.b32.xlu0 %v345, 15
    %v350 = vpop.permute.xlu0 %349
    %351 = vrot.lane.b32.xlu0 %v346, 15
    %v352 = vpop.permute.xlu0 %351
    %v353 = vsel %vm121, %v350, %v352
    %v354 = vsel %vm121, %v352, %v350
    %355 = vst [vmem:[#allocation1] ss:$4 sm:$0xff] %v286
    %v356 = vld.sshfl [vmem:[#allocation1] sm:$0xff pattern:$0x73625140]
    %v357 = vld.sshfl [vmem:[#allocation1 + $0x8] sm:$0xff pattern:$0x73625140]
    %360 = vrot.lane.b32.xlu0 %v356, 127
    %v361 = vpop.permute.xlu0 %360
    %362 = vrot.lane.b32.xlu0 %v357, 127
    %v363 = vpop.permute.xlu0 %362
    %v364 = vsel %vm133, %v361, %v363
    %v365 = vsel %vm133, %v363, %v361
    %v366 = vsel %vm54, %v354, %v364
    %v367 = vsel %vm55, %v353, %v365
    %v368 = vadd.f32 %v308, %v318
    %v369 = vadd.f32 %v307, %v319
    %v370 = vadd.f32 %v368, %v342
    %v371 = vadd.f32 %v369, %v343
    %v372 = vadd.f32 %v370, %v366
    %v373 = vadd.f32 %v371, %v367
    %v374 = vmul.f32 %v286, 4.0
    %376 = vst [vmem:[#allocation1] ss:$4 sm:$0xff] %v374
    %v377 = vld.sshfl [vmem:[#allocation1] sm:$0xff pattern:$0x73625140]
    %v378 = vld.sshfl [vmem:[#allocation1 + $0x8] sm:$0xff pattern:$0x73625140]
    %v381 = vsub.f32 %v372, %v377
    %v382 = vsub.f32 %v373, %v378
    %v383 = vmul.f32 %v381, 2.56
    %v384 = vmul.f32 %v382, 2.56
    %v385 = vadd.f32 %v383, 3.0
    %v386 = vadd.f32 %v384, 3.0
    %v387 = vmul.f32 %v286, 7.0
    %389 = vst [vmem:[#allocation1] ss:$4 sm:$0xff] %v387
    %v390 = vld.sshfl [vmem:[#allocation1] sm:$0xff pattern:$0x73625140]
    %v391 = vld.sshfl [vmem:[#allocation1 + $0x8] sm:$0xff pattern:$0x73625140]
    %v394 = vsub.f32 %v385, %v390
    %v395 = vsub.f32 %v386, %v391
    %397 = vst [vmem:[#allocation1] ss:$4 sm:$0xff] %v296
    %v398 = vld.sshfl [vmem:[#allocation1] sm:$0xff pattern:$0x73625140]
    %v399 = vld.sshfl [vmem:[#allocation1 + $0x8] sm:$0xff pattern:$0x73625140]
    %v402 = vadd.f32 %v394, %v398
    %v403 = vadd.f32 %v395, %v399
    %405 = vst [vmem:[#allocation1] ss:$4 sm:$0xff] %v294
    %v406 = vld.sshfl [vmem:[#allocation1] sm:$0xff pattern:$0x73625140]
    %v407 = vld.sshfl [vmem:[#allocation1 + $0x8] sm:$0xff pattern:$0x73625140]
    %410 = vrot.lane.b32.xlu0 %v406, 16
    %v411 = vpop.permute.xlu0 %410
    %412 = vrot.lane.b32.xlu0 %v407, 16
    %v413 = vpop.permute.xlu0 %412
    %v414 = vsel %vm71, %v411, %v413
    %v415 = vsel %vm71, %v413, %v411
    %416 = vst [vmem:[#allocation1] ss:$4 sm:$0xff] %v294
    %v417 = vld.sshfl [vmem:[#allocation1] sm:$0xff pattern:$0x73625140]
    %v418 = vld.sshfl [vmem:[#allocation1 + $0x8] sm:$0xff pattern:$0x73625140]
    %421 = vrot.lane.b32.xlu0 %v417, 112
    %v422 = vpop.permute.xlu0 %421
    %423 = vrot.lane.b32.xlu0 %v418, 112
    %v424 = vpop.permute.xlu0 %423
    %v425 = vsel %vm83, %v422, %v424
    %v426 = vsel %vm83, %v424, %v422
    %427 = vst [vmem:[#allocation1] ss:$4 sm:$0xff] %v294
    %v428 = vld.sshfl [vmem:[#allocation1] sm:$0xff pattern:$0x73625140]
    %v429 = vld.sshfl [vmem:[#allocation1 + $0x8] sm:$0xff pattern:$0x73625140]
    %432 = vrot.lane.b32.xlu0 %v428, 113
    %v433 = vpop.permute.xlu0 %432
    %434 = vrot.lane.b32.xlu0 %v429, 113
    %v435 = vpop.permute.xlu0 %434
    %v436 = vsel %vm95, %v433, %v435
    %v437 = vsel %vm95, %v435, %v433
    %438 = vst [vmem:[#allocation1] ss:$4 sm:$0xff] %v294
    %v439 = vld.sshfl [vmem:[#allocation1] sm:$0xff pattern:$0x73625140]
    %v440 = vld.sshfl [vmem:[#allocation1 + $0x8] sm:$0xff pattern:$0x73625140]
    %443 = vrot.lane.b32.xlu0 %v439, 1
    %v444 = vpop.permute.xlu0 %443
    %445 = vrot.lane.b32.xlu0 %v440, 1
    %v446 = vpop.permute.xlu0 %445
    %v447 = vsel %vm107, %v444, %v446
    %v448 = vsel %vm107, %v446, %v444
    %v449 = vsel %vm52, %v436, %v448
    %v450 = vsel %vm53, %v437, %v447
    %451 = vst [vmem:[#allocation1] ss:$4 sm:$0xff] %v294
    %v452 = vld.sshfl [vmem:[#allocation1] sm:$0xff pattern:$0x73625140]
    %v453 = vld.sshfl [vmem:[#allocation1 + $0x8] sm:$0xff pattern:$0x73625140]
    %456 = vrot.lane.b32.xlu0 %v452, 15
    %v457 = vpop.permute.xlu0 %456
    %458 = vrot.lane.b32.xlu0 %v453, 15
    %v459 = vpop.permute.xlu0 %458
    %v460 = vsel %vm121, %v457, %v459
    %v461 = vsel %vm121, %v459, %v457
    %462 = vst [vmem:[#allocation1] ss:$4 sm:$0xff] %v294
    %v463 = vld.sshfl [vmem:[#allocation1] sm:$0xff pattern:$0x73625140]
    %v464 = vld.sshfl [vmem:[#allocation1 + $0x8] sm:$0xff pattern:$0x73625140]
    %467 = vrot.lane.b32.xlu0 %v463, 127
    %v468 = vpop.permute.xlu0 %467
    %469 = vrot.lane.b32.xlu0 %v464, 127
    %v470 = vpop.permute.xlu0 %469
    %v471 = vsel %vm133, %v468, %v470
    %v472 = vsel %vm133, %v470, %v468
    %v473 = vsel %vm54, %v461, %v471
    %v474 = vsel %vm55, %v460, %v472
    %v475 = vadd.f32 %v415, %v425
    %v476 = vadd.f32 %v414, %v426
    %v477 = vadd.f32 %v475, %v449
    %v478 = vadd.f32 %v476, %v450
    %v479 = vadd.f32 %v477, %v473
    %v480 = vadd.f32 %v478, %v474
    %v481 = vmul.f32 %v294, 4.0
    %483 = vst [vmem:[#allocation1] ss:$4 sm:$0xff] %v481
    %v484 = vld.sshfl [vmem:[#allocation1] sm:$0xff pattern:$0x73625140]
    %v485 = vld.sshfl [vmem:[#allocation1 + $0x8] sm:$0xff pattern:$0x73625140]
    %v488 = vsub.f32 %v479, %v484
    %v489 = vsub.f32 %v480, %v485
    %v490 = vmul.f32 %v488, 12.8
    %v491 = vmul.f32 %v489, 12.8
    %v492 = vmul.f32 %v286, 6.0
    %494 = vst [vmem:[#allocation1] ss:$4 sm:$0xff] %v492
    %v495 = vld.sshfl [vmem:[#allocation1] sm:$0xff pattern:$0x73625140]
    %v496 = vld.sshfl [vmem:[#allocation1 + $0x8] sm:$0xff pattern:$0x73625140]
    %v499 = vadd.f32 %v490, %v495
    %v500 = vadd.f32 %v491, %v496
    %501 = vst [vmem:[#allocation1] ss:$4 sm:$0xff] %v296
    %v502 = vld.sshfl [vmem:[#allocation1] sm:$0xff pattern:$0x73625140]
    %v503 = vld.sshfl [vmem:[#allocation1 + $0x8] sm:$0xff pattern:$0x73625140]
    %v506 = vsub.f32 %v499, %v502
    %v507 = vsub.f32 %v500, %v503
    %v508 = vadd.f32 %v172, %v402
    %v509 = vadd.f32 %v173, %v403
    %v510 = vmul.f32 %v508, 0.025
    %v511 = vmul.f32 %v509, 0.025
    %v514 = vrot.slane %v511, 6
    %v515 = vsel %vm283, %v510, %v514
    %v517 = vadd.f32 %v56, %v515
    %v518 = vadd.f32 %v276, %v506
    %v519 = vadd.f32 %v277, %v507
    %v520 = vmul.f32 %v518, 0.025
    %v521 = vmul.f32 %v519, 0.025
    %v524 = vrot.slane %v521, 6
    %v525 = vsel %vm283, %v520, %v524
    %v527 = vadd.f32 %v58, %v525
    %v528 = vmul.f32 %v517, %v517
    %v529 = vmul.f32 %v528, %v527
    %531 = vst [vmem:[#allocation1] ss:$4 sm:$0xff] %v517
    %v532 = vld.sshfl [vmem:[#allocation1] sm:$0xff pattern:$0x73625140]
    %v533 = vld.sshfl [vmem:[#allocation1 + $0x8] sm:$0xff pattern:$0x73625140]
    %536 = vrot.lane.b32.xlu0 %v532, 16
    %v537 = vpop.permute.xlu0 %536
    %538 = vrot.lane.b32.xlu0 %v533, 16
    %v539 = vpop.permute.xlu0 %538
    %v540 = vsel %vm71, %v537, %v539
    %v541 = vsel %vm71, %v539, %v537
    %542 = vst [vmem:[#allocation1] ss:$4 sm:$0xff] %v517
    %v543 = vld.sshfl [vmem:[#allocation1] sm:$0xff pattern:$0x73625140]
    %v544 = vld.sshfl [vmem:[#allocation1 + $0x8] sm:$0xff pattern:$0x73625140]
    %547 = vrot.lane.b32.xlu0 %v543, 112
    %v548 = vpop.permute.xlu0 %547
    %549 = vrot.lane.b32.xlu0 %v544, 112
    %v550 = vpop.permute.xlu0 %549
    %v551 = vsel %vm83, %v548, %v550
    %v552 = vsel %vm83, %v550, %v548
    %553 = vst [vmem:[#allocation1] ss:$4 sm:$0xff] %v517
    %v554 = vld.sshfl [vmem:[#allocation1] sm:$0xff pattern:$0x73625140]
    %v555 = vld.sshfl [vmem:[#allocation1 + $0x8] sm:$0xff pattern:$0x73625140]
    %558 = vrot.lane.b32.xlu0 %v554, 113
    %v559 = vpop.permute.xlu0 %558
    %560 = vrot.lane.b32.xlu0 %v555, 113
    %v561 = vpop.permute.xlu0 %560
    %v562 = vsel %vm95, %v559, %v561
    %v563 = vsel %vm95, %v561, %v559
    %564 = vst [vmem:[#allocation1] ss:$4 sm:$0xff] %v517
    %v565 = vld.sshfl [vmem:[#allocation1] sm:$0xff pattern:$0x73625140]
    %v566 = vld.sshfl [vmem:[#allocation1 + $0x8] sm:$0xff pattern:$0x73625140]
    %569 = vrot.lane.b32.xlu0 %v565, 1
    %v570 = vpop.permute.xlu0 %569
    %571 = vrot.lane.b32.xlu0 %v566, 1
    %v572 = vpop.permute.xlu0 %571
    %v573 = vsel %vm107, %v570, %v572
    %v574 = vsel %vm107, %v572, %v570
    %v575 = vsel %vm52, %v562, %v574
    %v576 = vsel %vm53, %v563, %v573
    %577 = vst [vmem:[#allocation1] ss:$4 sm:$0xff] %v517
    %v578 = vld.sshfl [vmem:[#allocation1] sm:$0xff pattern:$0x73625140]
    %v579 = vld.sshfl [vmem:[#allocation1 + $0x8] sm:$0xff pattern:$0x73625140]
    %582 = vrot.lane.b32.xlu0 %v578, 15
    %v583 = vpop.permute.xlu0 %582
    %584 = vrot.lane.b32.xlu0 %v579, 15
    %v585 = vpop.permute.xlu0 %584
    %v586 = vsel %vm121, %v583, %v585
    %v587 = vsel %vm121, %v585, %v583
    %588 = vst [vmem:[#allocation1] ss:$4 sm:$0xff] %v517
    %v589 = vld.sshfl [vmem:[#allocation1] sm:$0xff pattern:$0x73625140]
    %v590 = vld.sshfl [vmem:[#allocation1 + $0x8] sm:$0xff pattern:$0x73625140]
    %593 = vrot.lane.b32.xlu0 %v589, 127
    %v594 = vpop.permute.xlu0 %593
    %595 = vrot.lane.b32.xlu0 %v590, 127
    %v596 = vpop.permute.xlu0 %595
    %v597 = vsel %vm133, %v594, %v596
    %v598 = vsel %vm133, %v596, %v594
    %v599 = vsel %vm54, %v587, %v597
    %v600 = vsel %vm55, %v586, %v598
    %v601 = vadd.f32 %v541, %v551
    %v602 = vadd.f32 %v540, %v552
    %v603 = vadd.f32 %v601, %v575
    %v604 = vadd.f32 %v602, %v576
    %v605 = vadd.f32 %v603, %v599
    %v606 = vadd.f32 %v604, %v600
    %v607 = vmul.f32 %v517, 4.0
    %609 = vst [vmem:[#allocation1] ss:$4 sm:$0xff] %v607
    %v610 = vld.sshfl [vmem:[#allocation1] sm:$0xff pattern:$0x73625140]
    %v611 = vld.sshfl [vmem:[#allocation1 + $0x8] sm:$0xff pattern:$0x73625140]
    %v614 = vsub.f32 %v605, %v610
    %v615 = vsub.f32 %v606, %v611
    %v616 = vmul.f32 %v614, 2.56
    %v617 = vmul.f32 %v615, 2.56
    %v618 = vadd.f32 %v616, 3.0
    %v619 = vadd.f32 %v617, 3.0
    %v620 = vmul.f32 %v517, 7.0
    %622 = vst [vmem:[#allocation1] ss:$4 sm:$0xff] %v620
    %v623 = vld.sshfl [vmem:[#allocation1] sm:$0xff pattern:$0x73625140]
    %v624 = vld.sshfl [vmem:[#allocation1 + $0x8] sm:$0xff pattern:$0x73625140]
    %v627 = vsub.f32 %v618, %v623
    %v628 = vsub.f32 %v619, %v624
    %630 = vst [vmem:[#allocation1] ss:$4 sm:$0xff] %v529
    %v631 = vld.sshfl [vmem:[#allocation1] sm:$0xff pattern:$0x73625140]
    %v632 = vld.sshfl [vmem:[#allocation1 + $0x8] sm:$0xff pattern:$0x73625140]
    %v635 = vadd.f32 %v627, %v631
    %v636 = vadd.f32 %v628, %v632
    %638 = vst [vmem:[#allocation1] ss:$4 sm:$0xff] %v527
    %v639 = vld.sshfl [vmem:[#allocation1] sm:$0xff pattern:$0x73625140]
    %v640 = vld.sshfl [vmem:[#allocation1 + $0x8] sm:$0xff pattern:$0x73625140]
    %643 = vrot.lane.b32.xlu0 %v639, 16
    %v644 = vpop.permute.xlu0 %643
    %645 = vrot.lane.b32.xlu0 %v640, 16
    %v646 = vpop.permute.xlu0 %645
    %v647 = vsel %vm71, %v644, %v646
    %v648 = vsel %vm71, %v646, %v644
    %649 = vst [vmem:[#allocation1] ss:$4 sm:$0xff] %v527
    %v650 = vld.sshfl [vmem:[#allocation1] sm:$0xff pattern:$0x73625140]
    %v651 = vld.sshfl [vmem:[#allocation1 + $0x8] sm:$0xff pattern:$0x73625140]
    %654 = vrot.lane.b32.xlu0 %v650, 112
    %v655 = vpop.permute.xlu0 %654
    %656 = vrot.lane.b32.xlu0 %v651, 112
    %v657 = vpop.permute.xlu0 %656
    %v658 = vsel %vm83, %v655, %v657
    %v659 = vsel %vm83, %v657, %v655
    %660 = vst [vmem:[#allocation1] ss:$4 sm:$0xff] %v527
    %v661 = vld.sshfl [vmem:[#allocation1] sm:$0xff pattern:$0x73625140]
    %v662 = vld.sshfl [vmem:[#allocation1 + $0x8] sm:$0xff pattern:$0x73625140]
    %665 = vrot.lane.b32.xlu0 %v661, 113
    %v666 = vpop.permute.xlu0 %665
    %667 = vrot.lane.b32.xlu0 %v662, 113
    %v668 = vpop.permute.xlu0 %667
    %v669 = vsel %vm95, %v666, %v668
    %v670 = vsel %vm95, %v668, %v666
    %671 = vst [vmem:[#allocation1] ss:$4 sm:$0xff] %v527
    %v672 = vld.sshfl [vmem:[#allocation1] sm:$0xff pattern:$0x73625140]
    %v673 = vld.sshfl [vmem:[#allocation1 + $0x8] sm:$0xff pattern:$0x73625140]
    %676 = vrot.lane.b32.xlu0 %v672, 1
    %v677 = vpop.permute.xlu0 %676
    %678 = vrot.lane.b32.xlu0 %v673, 1
    %v679 = vpop.permute.xlu0 %678
    %v680 = vsel %vm107, %v677, %v679
    %v681 = vsel %vm107, %v679, %v677
    %v682 = vsel %vm52, %v669, %v681
    %v683 = vsel %vm53, %v670, %v680
    %684 = vst [vmem:[#allocation1] ss:$4 sm:$0xff] %v527
    %v685 = vld.sshfl [vmem:[#allocation1] sm:$0xff pattern:$0x73625140]
    %v686 = vld.sshfl [vmem:[#allocation1 + $0x8] sm:$0xff pattern:$0x73625140]
    %689 = vrot.lane.b32.xlu0 %v685, 15
    %v690 = vpop.permute.xlu0 %689
    %691 = vrot.lane.b32.xlu0 %v686, 15
    %v692 = vpop.permute.xlu0 %691
    %v693 = vsel %vm121, %v690, %v692
    %v694 = vsel %vm121, %v692, %v690
    %695 = vst [vmem:[#allocation1] ss:$4 sm:$0xff] %v527
    %v696 = vld.sshfl [vmem:[#allocation1] sm:$0xff pattern:$0x73625140]
    %v697 = vld.sshfl [vmem:[#allocation1 + $0x8] sm:$0xff pattern:$0x73625140]
    %700 = vrot.lane.b32.xlu0 %v696, 127
    %v701 = vpop.permute.xlu0 %700
    %702 = vrot.lane.b32.xlu0 %v697, 127
    %v703 = vpop.permute.xlu0 %702
    %v704 = vsel %vm133, %v701, %v703
    %v705 = vsel %vm133, %v703, %v701
    %v706 = vsel %vm54, %v694, %v704
    %v707 = vsel %vm55, %v693, %v705
    %v708 = vadd.f32 %v648, %v658
    %v709 = vadd.f32 %v647, %v659
    %v710 = vadd.f32 %v708, %v682
    %v711 = vadd.f32 %v709, %v683
    %v712 = vadd.f32 %v710, %v706
    %v713 = vadd.f32 %v711, %v707
    %v714 = vmul.f32 %v527, 4.0
    %716 = vst [vmem:[#allocation1] ss:$4 sm:$0xff] %v714
    %v717 = vld.sshfl [vmem:[#allocation1] sm:$0xff pattern:$0x73625140]
    %v718 = vld.sshfl [vmem:[#allocation1 + $0x8] sm:$0xff pattern:$0x73625140]
    %v721 = vsub.f32 %v712, %v717
    %v722 = vsub.f32 %v713, %v718
    %v723 = vmul.f32 %v721, 12.8
    %v724 = vmul.f32 %v722, 12.8
    %v725 = vmul.f32 %v517, 6.0
    %727 = vst [vmem:[#allocation1] ss:$4 sm:$0xff] %v725
    %v728 = vld.sshfl [vmem:[#allocation1] sm:$0xff pattern:$0x73625140]
    %v729 = vld.sshfl [vmem:[#allocation1 + $0x8] sm:$0xff pattern:$0x73625140]
    %v732 = vadd.f32 %v723, %v728
    %v733 = vadd.f32 %v724, %v729
    %734 = vst [vmem:[#allocation1] ss:$4 sm:$0xff] %v529
    %v735 = vld.sshfl [vmem:[#allocation1] sm:$0xff pattern:$0x73625140]
    %v736 = vld.sshfl [vmem:[#allocation1 + $0x8] sm:$0xff pattern:$0x73625140]
    %v739 = vsub.f32 %v732, %v735
    %v740 = vsub.f32 %v733, %v736
    %v741 = vmul.f32 %v635, 0.05
    %v742 = vmul.f32 %v636, 0.05
    %v745 = vrot.slane %v742, 6
    %v746 = vsel %vm283, %v741, %v745
    %v748 = vadd.f32 %v517, %v746
    %v749 = vmul.f32 %v739, 0.05
    %v750 = vmul.f32 %v740, 0.05
    %v753 = vrot.slane %v750, 6
    %v754 = vsel %vm283, %v749, %v753
    %v756 = vadd.f32 %v527, %v754
    %v757 = vmul.f32 %v748, %v748
    %v758 = vmul.f32 %v757, %v756
    %760 = vst [vmem:[#allocation1] ss:$4 sm:$0xff] %v748
    %v761 = vld.sshfl [vmem:[#allocation1] sm:$0xff pattern:$0x73625140]
    %v762 = vld.sshfl [vmem:[#allocation1 + $0x8] sm:$0xff pattern:$0x73625140]
    %765 = vrot.lane.b32.xlu0 %v761, 16
    %v766 = vpop.permute.xlu0 %765
    %767 = vrot.lane.b32.xlu0 %v762, 16
    %v768 = vpop.permute.xlu0 %767
    %v769 = vsel %vm71, %v766, %v768
    %v770 = vsel %vm71, %v768, %v766
    %771 = vst [vmem:[#allocation1] ss:$4 sm:$0xff] %v748
    %v772 = vld.sshfl [vmem:[#allocation1] sm:$0xff pattern:$0x73625140]
    %v773 = vld.sshfl [vmem:[#allocation1 + $0x8] sm:$0xff pattern:$0x73625140]
    %776 = vrot.lane.b32.xlu0 %v772, 112
    %v777 = vpop.permute.xlu0 %776
    %778 = vrot.lane.b32.xlu0 %v773, 112
    %v779 = vpop.permute.xlu0 %778
    %v780 = vsel %vm83, %v777, %v779
    %v781 = vsel %vm83, %v779, %v777
    %782 = vst [vmem:[#allocation1] ss:$4 sm:$0xff] %v748
    %v783 = vld.sshfl [vmem:[#allocation1] sm:$0xff pattern:$0x73625140]
    %v784 = vld.sshfl [vmem:[#allocation1 + $0x8] sm:$0xff pattern:$0x73625140]
    %787 = vrot.lane.b32.xlu0 %v783, 113
    %v788 = vpop.permute.xlu0 %787
    %789 = vrot.lane.b32.xlu0 %v784, 113
    %v790 = vpop.permute.xlu0 %789
    %v791 = vsel %vm95, %v788, %v790
    %v792 = vsel %vm95, %v790, %v788
    %793 = vst [vmem:[#allocation1] ss:$4 sm:$0xff] %v748
    %v794 = vld.sshfl [vmem:[#allocation1] sm:$0xff pattern:$0x73625140]
    %v795 = vld.sshfl [vmem:[#allocation1 + $0x8] sm:$0xff pattern:$0x73625140]
    %798 = vrot.lane.b32.xlu0 %v794, 1
    %v799 = vpop.permute.xlu0 %798
    %800 = vrot.lane.b32.xlu0 %v795, 1
    %v801 = vpop.permute.xlu0 %800
    %v802 = vsel %vm107, %v799, %v801
    %v803 = vsel %vm107, %v801, %v799
    %v804 = vsel %vm52, %v791, %v803
    %v805 = vsel %vm53, %v792, %v802
    %806 = vst [vmem:[#allocation1] ss:$4 sm:$0xff] %v748
    %v807 = vld.sshfl [vmem:[#allocation1] sm:$0xff pattern:$0x73625140]
    %v808 = vld.sshfl [vmem:[#allocation1 + $0x8] sm:$0xff pattern:$0x73625140]
    %811 = vrot.lane.b32.xlu0 %v807, 15
    %v812 = vpop.permute.xlu0 %811
    %813 = vrot.lane.b32.xlu0 %v808, 15
    %v814 = vpop.permute.xlu0 %813
    %v815 = vsel %vm121, %v812, %v814
    %v816 = vsel %vm121, %v814, %v812
    %817 = vst [vmem:[#allocation1] ss:$4 sm:$0xff] %v748
    %v818 = vld.sshfl [vmem:[#allocation1] sm:$0xff pattern:$0x73625140]
    %v819 = vld.sshfl [vmem:[#allocation1 + $0x8] sm:$0xff pattern:$0x73625140]
    %822 = vrot.lane.b32.xlu0 %v818, 127
    %v823 = vpop.permute.xlu0 %822
    %824 = vrot.lane.b32.xlu0 %v819, 127
    %v825 = vpop.permute.xlu0 %824
    %v826 = vsel %vm133, %v823, %v825
    %v827 = vsel %vm133, %v825, %v823
    %v828 = vsel %vm54, %v816, %v826
    %v829 = vsel %vm55, %v815, %v827
    %v830 = vadd.f32 %v770, %v780
    %v831 = vadd.f32 %v769, %v781
    %v832 = vadd.f32 %v830, %v804
    %v833 = vadd.f32 %v831, %v805
    %v834 = vadd.f32 %v832, %v828
    %v835 = vadd.f32 %v833, %v829
    %v836 = vmul.f32 %v748, 4.0
    %838 = vst [vmem:[#allocation1] ss:$4 sm:$0xff] %v836
    %v839 = vld.sshfl [vmem:[#allocation1] sm:$0xff pattern:$0x73625140]
    %v840 = vld.sshfl [vmem:[#allocation1 + $0x8] sm:$0xff pattern:$0x73625140]
    %v843 = vsub.f32 %v834, %v839
    %v844 = vsub.f32 %v835, %v840
    %v845 = vmul.f32 %v843, 2.56
    %v846 = vmul.f32 %v844, 2.56
    %v847 = vadd.f32 %v845, 3.0
    %v848 = vadd.f32 %v846, 3.0
    %v849 = vmul.f32 %v748, 7.0
    %851 = vst [vmem:[#allocation1] ss:$4 sm:$0xff] %v849
    %v852 = vld.sshfl [vmem:[#allocation1] sm:$0xff pattern:$0x73625140]
    %v853 = vld.sshfl [vmem:[#allocation1 + $0x8] sm:$0xff pattern:$0x73625140]
    %v856 = vsub.f32 %v847, %v852
    %v857 = vsub.f32 %v848, %v853
    %859 = vst [vmem:[#allocation1] ss:$4 sm:$0xff] %v758
    %v860 = vld.sshfl [vmem:[#allocation1] sm:$0xff pattern:$0x73625140]
    %v861 = vld.sshfl [vmem:[#allocation1 + $0x8] sm:$0xff pattern:$0x73625140]
    %v864 = vadd.f32 %v856, %v860
    %v865 = vadd.f32 %v857, %v861
    %867 = vst [vmem:[#allocation1] ss:$4 sm:$0xff] %v756
    %v868 = vld.sshfl [vmem:[#allocation1] sm:$0xff pattern:$0x73625140]
    %v869 = vld.sshfl [vmem:[#allocation1 + $0x8] sm:$0xff pattern:$0x73625140]
    %872 = vrot.lane.b32.xlu0 %v868, 16
    %v873 = vpop.permute.xlu0 %872
    %874 = vrot.lane.b32.xlu0 %v869, 16
    %v875 = vpop.permute.xlu0 %874
    %v876 = vsel %vm71, %v873, %v875
    %v877 = vsel %vm71, %v875, %v873
    %878 = vst [vmem:[#allocation1] ss:$4 sm:$0xff] %v756
    %v879 = vld.sshfl [vmem:[#allocation1] sm:$0xff pattern:$0x73625140]
    %v880 = vld.sshfl [vmem:[#allocation1 + $0x8] sm:$0xff pattern:$0x73625140]
    %883 = vrot.lane.b32.xlu0 %v879, 112
    %v884 = vpop.permute.xlu0 %883
    %885 = vrot.lane.b32.xlu0 %v880, 112
    %v886 = vpop.permute.xlu0 %885
    %v887 = vsel %vm83, %v884, %v886
    %v888 = vsel %vm83, %v886, %v884
    %889 = vst [vmem:[#allocation1] ss:$4 sm:$0xff] %v756
    %v890 = vld.sshfl [vmem:[#allocation1] sm:$0xff pattern:$0x73625140]
    %v891 = vld.sshfl [vmem:[#allocation1 + $0x8] sm:$0xff pattern:$0x73625140]
    %894 = vrot.lane.b32.xlu0 %v890, 113
    %v895 = vpop.permute.xlu0 %894
    %896 = vrot.lane.b32.xlu0 %v891, 113
    %v897 = vpop.permute.xlu0 %896
    %v898 = vsel %vm95, %v895, %v897
    %v899 = vsel %vm95, %v897, %v895
    %900 = vst [vmem:[#allocation1] ss:$4 sm:$0xff] %v756
    %v901 = vld.sshfl [vmem:[#allocation1] sm:$0xff pattern:$0x73625140]
    %v902 = vld.sshfl [vmem:[#allocation1 + $0x8] sm:$0xff pattern:$0x73625140]
    %905 = vrot.lane.b32.xlu0 %v901, 1
    %v906 = vpop.permute.xlu0 %905
    %907 = vrot.lane.b32.xlu0 %v902, 1
    %v908 = vpop.permute.xlu0 %907
    %v909 = vsel %vm107, %v906, %v908
    %v910 = vsel %vm107, %v908, %v906
    %v911 = vsel %vm52, %v898, %v910
    %v912 = vsel %vm53, %v899, %v909
    %913 = vst [vmem:[#allocation1] ss:$4 sm:$0xff] %v756
    %v914 = vld.sshfl [vmem:[#allocation1] sm:$0xff pattern:$0x73625140]
    %v915 = vld.sshfl [vmem:[#allocation1 + $0x8] sm:$0xff pattern:$0x73625140]
    %918 = vrot.lane.b32.xlu0 %v914, 15
    %v919 = vpop.permute.xlu0 %918
    %920 = vrot.lane.b32.xlu0 %v915, 15
    %v921 = vpop.permute.xlu0 %920
    %v922 = vsel %vm121, %v919, %v921
    %v923 = vsel %vm121, %v921, %v919
    %924 = vst [vmem:[#allocation1] ss:$4 sm:$0xff] %v756
    %v925 = vld.sshfl [vmem:[#allocation1] sm:$0xff pattern:$0x73625140]
    %v926 = vld.sshfl [vmem:[#allocation1 + $0x8] sm:$0xff pattern:$0x73625140]
    %929 = vrot.lane.b32.xlu0 %v925, 127
    %v930 = vpop.permute.xlu0 %929
    %931 = vrot.lane.b32.xlu0 %v926, 127
    %v932 = vpop.permute.xlu0 %931
    %v933 = vsel %vm133, %v930, %v932
    %v934 = vsel %vm133, %v932, %v930
    %v935 = vsel %vm54, %v923, %v933
    %v936 = vsel %vm55, %v922, %v934
    %v937 = vadd.f32 %v877, %v887
    %v938 = vadd.f32 %v876, %v888
    %v939 = vadd.f32 %v937, %v911
    %v940 = vadd.f32 %v938, %v912
    %v941 = vadd.f32 %v939, %v935
    %v942 = vadd.f32 %v940, %v936
    %v943 = vmul.f32 %v756, 4.0
    %945 = vst [vmem:[#allocation1] ss:$4 sm:$0xff] %v943
    %v946 = vld.sshfl [vmem:[#allocation1] sm:$0xff pattern:$0x73625140]
    %v947 = vld.sshfl [vmem:[#allocation1 + $0x8] sm:$0xff pattern:$0x73625140]
    %v950 = vsub.f32 %v941, %v946
    %v951 = vsub.f32 %v942, %v947
    %v952 = vmul.f32 %v950, 12.8
    %v953 = vmul.f32 %v951, 12.8
    %v954 = vmul.f32 %v748, 6.0
    %956 = vst [vmem:[#allocation1] ss:$4 sm:$0xff] %v954
    %v957 = vld.sshfl [vmem:[#allocation1] sm:$0xff pattern:$0x73625140]
    %v958 = vld.sshfl [vmem:[#allocation1 + $0x8] sm:$0xff pattern:$0x73625140]
    %v961 = vadd.f32 %v952, %v957
    %v962 = vadd.f32 %v953, %v958
    %963 = vst [vmem:[#allocation1] ss:$4 sm:$0xff] %v758
    %v964 = vld.sshfl [vmem:[#allocation1] sm:$0xff pattern:$0x73625140]
    %v965 = vld.sshfl [vmem:[#allocation1 + $0x8] sm:$0xff pattern:$0x73625140]
    %v968 = vsub.f32 %v961, %v964
    %v969 = vsub.f32 %v962, %v965
    %v970 = vadd.f32 %v635, %v864
    %v971 = vadd.f32 %v636, %v865
    %v972 = vmul.f32 %v970, 0.025
    %v973 = vmul.f32 %v971, 0.025
    %v976 = vrot.slane %v973, 6
    %v977 = vsel %vm283, %v972, %v976
    %v979 = vadd.f32 %v517, %v977
    %v980 = vadd.f32 %v739, %v968
    %v981 = vadd.f32 %v740, %v969
    %v982 = vmul.f32 %v980, 0.025
    %v983 = vmul.f32 %v981, 0.025
    %v986 = vrot.slane %v983, 6
    %v987 = vsel %vm283, %v982, %v986
    %v989 = vadd.f32 %v527, %v987
    %v990 = vmul.f32 %v979, %v979
    %v991 = vmul.f32 %v990, %v989
    %993 = vst [vmem:[#allocation1] ss:$4 sm:$0xff] %v979
    %v994 = vld.sshfl [vmem:[#allocation1] sm:$0xff pattern:$0x73625140]
    %v995 = vld.sshfl [vmem:[#allocation1 + $0x8] sm:$0xff pattern:$0x73625140]
    %998 = vrot.lane.b32.xlu0 %v994, 16
    %v999 = vpop.permute.xlu0 %998
    %1000 = vrot.lane.b32.xlu0 %v995, 16
    %v1001 = vpop.permute.xlu0 %1000
    %v1002 = vsel %vm71, %v999, %v1001
    %v1003 = vsel %vm71, %v1001, %v999
    %1004 = vst [vmem:[#allocation1] ss:$4 sm:$0xff] %v979
    %v1005 = vld.sshfl [vmem:[#allocation1] sm:$0xff pattern:$0x73625140]
    %v1006 = vld.sshfl [vmem:[#allocation1 + $0x8] sm:$0xff pattern:$0x73625140]
    %1009 = vrot.lane.b32.xlu0 %v1005, 112
    %v1010 = vpop.permute.xlu0 %1009
    %1011 = vrot.lane.b32.xlu0 %v1006, 112
    %v1012 = vpop.permute.xlu0 %1011
    %v1013 = vsel %vm83, %v1010, %v1012
    %v1014 = vsel %vm83, %v1012, %v1010
    %1015 = vst [vmem:[#allocation1] ss:$4 sm:$0xff] %v979
    %v1016 = vld.sshfl [vmem:[#allocation1] sm:$0xff pattern:$0x73625140]
    %v1017 = vld.sshfl [vmem:[#allocation1 + $0x8] sm:$0xff pattern:$0x73625140]
    %1020 = vrot.lane.b32.xlu0 %v1016, 113
    %v1021 = vpop.permute.xlu0 %1020
    %1022 = vrot.lane.b32.xlu0 %v1017, 113
    %v1023 = vpop.permute.xlu0 %1022
    %v1024 = vsel %vm95, %v1021, %v1023
    %v1025 = vsel %vm95, %v1023, %v1021
    %1026 = vst [vmem:[#allocation1] ss:$4 sm:$0xff] %v979
    %v1027 = vld.sshfl [vmem:[#allocation1] sm:$0xff pattern:$0x73625140]
    %v1028 = vld.sshfl [vmem:[#allocation1 + $0x8] sm:$0xff pattern:$0x73625140]
    %1031 = vrot.lane.b32.xlu0 %v1027, 1
    %v1032 = vpop.permute.xlu0 %1031
    %1033 = vrot.lane.b32.xlu0 %v1028, 1
    %v1034 = vpop.permute.xlu0 %1033
    %v1035 = vsel %vm107, %v1032, %v1034
    %v1036 = vsel %vm107, %v1034, %v1032
    %v1037 = vsel %vm52, %v1024, %v1036
    %v1038 = vsel %vm53, %v1025, %v1035
    %1039 = vst [vmem:[#allocation1] ss:$4 sm:$0xff] %v979
    %v1040 = vld.sshfl [vmem:[#allocation1] sm:$0xff pattern:$0x73625140]
    %v1041 = vld.sshfl [vmem:[#allocation1 + $0x8] sm:$0xff pattern:$0x73625140]
    %1044 = vrot.lane.b32.xlu0 %v1040, 15
    %v1045 = vpop.permute.xlu0 %1044
    %1046 = vrot.lane.b32.xlu0 %v1041, 15
    %v1047 = vpop.permute.xlu0 %1046
    %v1048 = vsel %vm121, %v1045, %v1047
    %v1049 = vsel %vm121, %v1047, %v1045
    %1050 = vst [vmem:[#allocation1] ss:$4 sm:$0xff] %v979
    %v1051 = vld.sshfl [vmem:[#allocation1] sm:$0xff pattern:$0x73625140]
    %v1052 = vld.sshfl [vmem:[#allocation1 + $0x8] sm:$0xff pattern:$0x73625140]
    %1055 = vrot.lane.b32.xlu0 %v1051, 127
    %v1056 = vpop.permute.xlu0 %1055
    %1057 = vrot.lane.b32.xlu0 %v1052, 127
    %v1058 = vpop.permute.xlu0 %1057
    %v1059 = vsel %vm133, %v1056, %v1058
    %v1060 = vsel %vm133, %v1058, %v1056
    %v1061 = vsel %vm54, %v1049, %v1059
    %v1062 = vsel %vm55, %v1048, %v1060
    %v1063 = vadd.f32 %v1003, %v1013
    %v1064 = vadd.f32 %v1002, %v1014
    %v1065 = vadd.f32 %v1063, %v1037
    %v1066 = vadd.f32 %v1064, %v1038
    %v1067 = vadd.f32 %v1065, %v1061
    %v1068 = vadd.f32 %v1066, %v1062
    %v1069 = vmul.f32 %v979, 4.0
    %1071 = vst [vmem:[#allocation1] ss:$4 sm:$0xff] %v1069
    %v1072 = vld.sshfl [vmem:[#allocation1] sm:$0xff pattern:$0x73625140]
    %v1073 = vld.sshfl [vmem:[#allocation1 + $0x8] sm:$0xff pattern:$0x73625140]
    %v1076 = vsub.f32 %v1067, %v1072
    %v1077 = vsub.f32 %v1068, %v1073
    %v1078 = vmul.f32 %v1076, 2.56
    %v1079 = vmul.f32 %v1077, 2.56
    %v1080 = vadd.f32 %v1078, 3.0
    %v1081 = vadd.f32 %v1079, 3.0
    %v1082 = vmul.f32 %v979, 7.0
    %1084 = vst [vmem:[#allocation1] ss:$4 sm:$0xff] %v1082
    %v1085 = vld.sshfl [vmem:[#allocation1] sm:$0xff pattern:$0x73625140]
    %v1086 = vld.sshfl [vmem:[#allocation1 + $0x8] sm:$0xff pattern:$0x73625140]
    %v1089 = vsub.f32 %v1080, %v1085
    %v1090 = vsub.f32 %v1081, %v1086
    %1092 = vst [vmem:[#allocation1] ss:$4 sm:$0xff] %v991
    %v1093 = vld.sshfl [vmem:[#allocation1] sm:$0xff pattern:$0x73625140]
    %v1094 = vld.sshfl [vmem:[#allocation1 + $0x8] sm:$0xff pattern:$0x73625140]
    %v1097 = vadd.f32 %v1089, %v1093
    %v1098 = vadd.f32 %v1090, %v1094
    %1100 = vst [vmem:[#allocation1] ss:$4 sm:$0xff] %v989
    %v1101 = vld.sshfl [vmem:[#allocation1] sm:$0xff pattern:$0x73625140]
    %v1102 = vld.sshfl [vmem:[#allocation1 + $0x8] sm:$0xff pattern:$0x73625140]
    %1105 = vrot.lane.b32.xlu0 %v1101, 16
    %v1106 = vpop.permute.xlu0 %1105
    %1107 = vrot.lane.b32.xlu0 %v1102, 16
    %v1108 = vpop.permute.xlu0 %1107
    %v1109 = vsel %vm71, %v1106, %v1108
    %v1110 = vsel %vm71, %v1108, %v1106
    %1111 = vst [vmem:[#allocation1] ss:$4 sm:$0xff] %v989
    %v1112 = vld.sshfl [vmem:[#allocation1] sm:$0xff pattern:$0x73625140]
    %v1113 = vld.sshfl [vmem:[#allocation1 + $0x8] sm:$0xff pattern:$0x73625140]
    %1116 = vrot.lane.b32.xlu0 %v1112, 112
    %v1117 = vpop.permute.xlu0 %1116
    %1118 = vrot.lane.b32.xlu0 %v1113, 112
    %v1119 = vpop.permute.xlu0 %1118
    %v1120 = vsel %vm83, %v1117, %v1119
    %v1121 = vsel %vm83, %v1119, %v1117
    %1122 = vst [vmem:[#allocation1] ss:$4 sm:$0xff] %v989
    %v1123 = vld.sshfl [vmem:[#allocation1] sm:$0xff pattern:$0x73625140]
    %v1124 = vld.sshfl [vmem:[#allocation1 + $0x8] sm:$0xff pattern:$0x73625140]
    %1127 = vrot.lane.b32.xlu0 %v1123, 113
    %v1128 = vpop.permute.xlu0 %1127
    %1129 = vrot.lane.b32.xlu0 %v1124, 113
    %v1130 = vpop.permute.xlu0 %1129
    %v1131 = vsel %vm95, %v1128, %v1130
    %v1132 = vsel %vm95, %v1130, %v1128
    %1133 = vst [vmem:[#allocation1] ss:$4 sm:$0xff] %v989
    %v1134 = vld.sshfl [vmem:[#allocation1] sm:$0xff pattern:$0x73625140]
    %v1135 = vld.sshfl [vmem:[#allocation1 + $0x8] sm:$0xff pattern:$0x73625140]
    %1138 = vrot.lane.b32.xlu0 %v1134, 1
    %v1139 = vpop.permute.xlu0 %1138
    %1140 = vrot.lane.b32.xlu0 %v1135, 1
    %v1141 = vpop.permute.xlu0 %1140
    %v1142 = vsel %vm107, %v1139, %v1141
    %v1143 = vsel %vm107, %v1141, %v1139
    %v1144 = vsel %vm52, %v1131, %v1143
    %v1145 = vsel %vm53, %v1132, %v1142
    %1146 = vst [vmem:[#allocation1] ss:$4 sm:$0xff] %v989
    %v1147 = vld.sshfl [vmem:[#allocation1] sm:$0xff pattern:$0x73625140]
    %v1148 = vld.sshfl [vmem:[#allocation1 + $0x8] sm:$0xff pattern:$0x73625140]
    %1151 = vrot.lane.b32.xlu0 %v1147, 15
    %v1152 = vpop.permute.xlu0 %1151
    %1153 = vrot.lane.b32.xlu0 %v1148, 15
    %v1154 = vpop.permute.xlu0 %1153
    %v1155 = vsel %vm121, %v1152, %v1154
    %v1156 = vsel %vm121, %v1154, %v1152
    %1157 = vst [vmem:[#allocation1] ss:$4 sm:$0xff] %v989
    %v1158 = vld.sshfl [vmem:[#allocation1] sm:$0xff pattern:$0x73625140]
    %v1159 = vld.sshfl [vmem:[#allocation1 + $0x8] sm:$0xff pattern:$0x73625140]
    %1162 = vrot.lane.b32.xlu0 %v1158, 127
    %v1163 = vpop.permute.xlu0 %1162
    %1164 = vrot.lane.b32.xlu0 %v1159, 127
    %v1165 = vpop.permute.xlu0 %1164
    %v1166 = vsel %vm133, %v1163, %v1165
    %v1167 = vsel %vm133, %v1165, %v1163
    %v1168 = vsel %vm54, %v1156, %v1166
    %v1169 = vsel %vm55, %v1155, %v1167
    %v1170 = vadd.f32 %v1110, %v1120
    %v1171 = vadd.f32 %v1109, %v1121
    %v1172 = vadd.f32 %v1170, %v1144
    %v1173 = vadd.f32 %v1171, %v1145
    %v1174 = vadd.f32 %v1172, %v1168
    %v1175 = vadd.f32 %v1173, %v1169
    %v1176 = vmul.f32 %v989, 4.0
    %1178 = vst [vmem:[#allocation1] ss:$4 sm:$0xff] %v1176
    %v1179 = vld.sshfl [vmem:[#allocation1] sm:$0xff pattern:$0x73625140]
    %v1180 = vld.sshfl [vmem:[#allocation1 + $0x8] sm:$0xff pattern:$0x73625140]
    %v1183 = vsub.f32 %v1174, %v1179
    %v1184 = vsub.f32 %v1175, %v1180
    %v1185 = vmul.f32 %v1183, 12.8
    %v1186 = vmul.f32 %v1184, 12.8
    %v1187 = vmul.f32 %v979, 6.0
    %1189 = vst [vmem:[#allocation1] ss:$4 sm:$0xff] %v1187
    %v1190 = vld.sshfl [vmem:[#allocation1] sm:$0xff pattern:$0x73625140]
    %v1191 = vld.sshfl [vmem:[#allocation1 + $0x8] sm:$0xff pattern:$0x73625140]
    %v1194 = vadd.f32 %v1185, %v1190
    %v1195 = vadd.f32 %v1186, %v1191
    %1196 = vst [vmem:[#allocation1] ss:$4 sm:$0xff] %v991
    %v1197 = vld.sshfl [vmem:[#allocation1] sm:$0xff pattern:$0x73625140]
    %v1198 = vld.sshfl [vmem:[#allocation1 + $0x8] sm:$0xff pattern:$0x73625140]
    %v1201 = vsub.f32 %v1194, %v1197
    %v1202 = vsub.f32 %v1195, %v1198
    %v1203 = vmul.f32 %v1097, 0.05
    %v1204 = vmul.f32 %v1098, 0.05
    %v1207 = vrot.slane %v1204, 6
    %v1208 = vsel %vm283, %v1203, %v1207
    %v1210 = vadd.f32 %v979, %v1208
    %v1211 = vmul.f32 %v1201, 0.05
    %v1212 = vmul.f32 %v1202, 0.05
    %v1215 = vrot.slane %v1212, 6
    %v1216 = vsel %vm283, %v1211, %v1215
    %v1218 = vadd.f32 %v989, %v1216
    %v1219 = vmul.f32 %v1210, %v1210
    %v1220 = vmul.f32 %v1219, %v1218
    %1222 = vst [vmem:[#allocation1] ss:$4 sm:$0xff] %v1210
    %v1223 = vld.sshfl [vmem:[#allocation1] sm:$0xff pattern:$0x73625140]
    %v1224 = vld.sshfl [vmem:[#allocation1 + $0x8] sm:$0xff pattern:$0x73625140]
    %1227 = vrot.lane.b32.xlu0 %v1223, 16
    %v1228 = vpop.permute.xlu0 %1227
    %1229 = vrot.lane.b32.xlu0 %v1224, 16
    %v1230 = vpop.permute.xlu0 %1229
    %v1231 = vsel %vm71, %v1228, %v1230
    %v1232 = vsel %vm71, %v1230, %v1228
    %1233 = vst [vmem:[#allocation1] ss:$4 sm:$0xff] %v1210
    %v1234 = vld.sshfl [vmem:[#allocation1] sm:$0xff pattern:$0x73625140]
    %v1235 = vld.sshfl [vmem:[#allocation1 + $0x8] sm:$0xff pattern:$0x73625140]
    %1238 = vrot.lane.b32.xlu0 %v1234, 112
    %v1239 = vpop.permute.xlu0 %1238
    %1240 = vrot.lane.b32.xlu0 %v1235, 112
    %v1241 = vpop.permute.xlu0 %1240
    %v1242 = vsel %vm83, %v1239, %v1241
    %v1243 = vsel %vm83, %v1241, %v1239
    %1244 = vst [vmem:[#allocation1] ss:$4 sm:$0xff] %v1210
    %v1245 = vld.sshfl [vmem:[#allocation1] sm:$0xff pattern:$0x73625140]
    %v1246 = vld.sshfl [vmem:[#allocation1 + $0x8] sm:$0xff pattern:$0x73625140]
    %1249 = vrot.lane.b32.xlu0 %v1245, 113
    %v1250 = vpop.permute.xlu0 %1249
    %1251 = vrot.lane.b32.xlu0 %v1246, 113
    %v1252 = vpop.permute.xlu0 %1251
    %v1253 = vsel %vm95, %v1250, %v1252
    %v1254 = vsel %vm95, %v1252, %v1250
    %1255 = vst [vmem:[#allocation1] ss:$4 sm:$0xff] %v1210
    %v1256 = vld.sshfl [vmem:[#allocation1] sm:$0xff pattern:$0x73625140]
    %v1257 = vld.sshfl [vmem:[#allocation1 + $0x8] sm:$0xff pattern:$0x73625140]
    %1260 = vrot.lane.b32.xlu0 %v1256, 1
    %v1261 = vpop.permute.xlu0 %1260
    %1262 = vrot.lane.b32.xlu0 %v1257, 1
    %v1263 = vpop.permute.xlu0 %1262
    %v1264 = vsel %vm107, %v1261, %v1263
    %v1265 = vsel %vm107, %v1263, %v1261
    %v1266 = vsel %vm52, %v1253, %v1265
    %v1267 = vsel %vm53, %v1254, %v1264
    %1268 = vst [vmem:[#allocation1] ss:$4 sm:$0xff] %v1210
    %v1269 = vld.sshfl [vmem:[#allocation1] sm:$0xff pattern:$0x73625140]
    %v1270 = vld.sshfl [vmem:[#allocation1 + $0x8] sm:$0xff pattern:$0x73625140]
    %1273 = vrot.lane.b32.xlu0 %v1269, 15
    %v1274 = vpop.permute.xlu0 %1273
    %1275 = vrot.lane.b32.xlu0 %v1270, 15
    %v1276 = vpop.permute.xlu0 %1275
    %v1277 = vsel %vm121, %v1274, %v1276
    %v1278 = vsel %vm121, %v1276, %v1274
    %1279 = vst [vmem:[#allocation1] ss:$4 sm:$0xff] %v1210
    %v1280 = vld.sshfl [vmem:[#allocation1] sm:$0xff pattern:$0x73625140]
    %v1281 = vld.sshfl [vmem:[#allocation1 + $0x8] sm:$0xff pattern:$0x73625140]
    %1284 = vrot.lane.b32.xlu0 %v1280, 127
    %v1285 = vpop.permute.xlu0 %1284
    %1286 = vrot.lane.b32.xlu0 %v1281, 127
    %v1287 = vpop.permute.xlu0 %1286
    %v1288 = vsel %vm133, %v1285, %v1287
    %v1289 = vsel %vm133, %v1287, %v1285
    %v1290 = vsel %vm54, %v1278, %v1288
    %v1291 = vsel %vm55, %v1277, %v1289
    %v1292 = vadd.f32 %v1232, %v1242
    %v1293 = vadd.f32 %v1231, %v1243
    %v1294 = vadd.f32 %v1292, %v1266
    %v1295 = vadd.f32 %v1293, %v1267
    %v1296 = vadd.f32 %v1294, %v1290
    %v1297 = vadd.f32 %v1295, %v1291
    %v1298 = vmul.f32 %v1210, 4.0
    %1300 = vst [vmem:[#allocation1] ss:$4 sm:$0xff] %v1298
    %v1301 = vld.sshfl [vmem:[#allocation1] sm:$0xff pattern:$0x73625140]
    %v1302 = vld.sshfl [vmem:[#allocation1 + $0x8] sm:$0xff pattern:$0x73625140]
    %v1305 = vsub.f32 %v1296, %v1301
    %v1306 = vsub.f32 %v1297, %v1302
    %v1307 = vmul.f32 %v1305, 2.56
    %v1308 = vmul.f32 %v1306, 2.56
    %v1309 = vadd.f32 %v1307, 3.0
    %v1310 = vadd.f32 %v1308, 3.0
    %v1311 = vmul.f32 %v1210, 7.0
    %1313 = vst [vmem:[#allocation1] ss:$4 sm:$0xff] %v1311
    %v1314 = vld.sshfl [vmem:[#allocation1] sm:$0xff pattern:$0x73625140]
    %v1315 = vld.sshfl [vmem:[#allocation1 + $0x8] sm:$0xff pattern:$0x73625140]
    %v1318 = vsub.f32 %v1309, %v1314
    %v1319 = vsub.f32 %v1310, %v1315
    %1321 = vst [vmem:[#allocation1] ss:$4 sm:$0xff] %v1220
    %v1322 = vld.sshfl [vmem:[#allocation1] sm:$0xff pattern:$0x73625140]
    %v1323 = vld.sshfl [vmem:[#allocation1 + $0x8] sm:$0xff pattern:$0x73625140]
    %v1326 = vadd.f32 %v1318, %v1322
    %v1327 = vadd.f32 %v1319, %v1323
    %1329 = vst [vmem:[#allocation1] ss:$4 sm:$0xff] %v1218
    %v1330 = vld.sshfl [vmem:[#allocation1] sm:$0xff pattern:$0x73625140]
    %v1331 = vld.sshfl [vmem:[#allocation1 + $0x8] sm:$0xff pattern:$0x73625140]
    %1334 = vrot.lane.b32.xlu0 %v1330, 16
    %v1335 = vpop.permute.xlu0 %1334
    %1336 = vrot.lane.b32.xlu0 %v1331, 16
    %v1337 = vpop.permute.xlu0 %1336
    %v1338 = vsel %vm71, %v1335, %v1337
    %v1339 = vsel %vm71, %v1337, %v1335
    %1340 = vst [vmem:[#allocation1] ss:$4 sm:$0xff] %v1218
    %v1341 = vld.sshfl [vmem:[#allocation1] sm:$0xff pattern:$0x73625140]
    %v1342 = vld.sshfl [vmem:[#allocation1 + $0x8] sm:$0xff pattern:$0x73625140]
    %1345 = vrot.lane.b32.xlu0 %v1341, 112
    %v1346 = vpop.permute.xlu0 %1345
    %1347 = vrot.lane.b32.xlu0 %v1342, 112
    %v1348 = vpop.permute.xlu0 %1347
    %v1349 = vsel %vm83, %v1346, %v1348
    %v1350 = vsel %vm83, %v1348, %v1346
    %1351 = vst [vmem:[#allocation1] ss:$4 sm:$0xff] %v1218
    %v1352 = vld.sshfl [vmem:[#allocation1] sm:$0xff pattern:$0x73625140]
    %v1353 = vld.sshfl [vmem:[#allocation1 + $0x8] sm:$0xff pattern:$0x73625140]
    %1356 = vrot.lane.b32.xlu0 %v1352, 113
    %v1357 = vpop.permute.xlu0 %1356
    %1358 = vrot.lane.b32.xlu0 %v1353, 113
    %v1359 = vpop.permute.xlu0 %1358
    %v1360 = vsel %vm95, %v1357, %v1359
    %v1361 = vsel %vm95, %v1359, %v1357
    %1362 = vst [vmem:[#allocation1] ss:$4 sm:$0xff] %v1218
    %v1363 = vld.sshfl [vmem:[#allocation1] sm:$0xff pattern:$0x73625140]
    %v1364 = vld.sshfl [vmem:[#allocation1 + $0x8] sm:$0xff pattern:$0x73625140]
    %1367 = vrot.lane.b32.xlu0 %v1363, 1
    %v1368 = vpop.permute.xlu0 %1367
    %1369 = vrot.lane.b32.xlu0 %v1364, 1
    %v1370 = vpop.permute.xlu0 %1369
    %v1371 = vsel %vm107, %v1368, %v1370
    %v1372 = vsel %vm107, %v1370, %v1368
    %v1373 = vsel %vm52, %v1360, %v1372
    %v1374 = vsel %vm53, %v1361, %v1371
    %1375 = vst [vmem:[#allocation1] ss:$4 sm:$0xff] %v1218
    %v1376 = vld.sshfl [vmem:[#allocation1] sm:$0xff pattern:$0x73625140]
    %v1377 = vld.sshfl [vmem:[#allocation1 + $0x8] sm:$0xff pattern:$0x73625140]
    %1380 = vrot.lane.b32.xlu0 %v1376, 15
    %v1381 = vpop.permute.xlu0 %1380
    %1382 = vrot.lane.b32.xlu0 %v1377, 15
    %v1383 = vpop.permute.xlu0 %1382
    %v1384 = vsel %vm121, %v1381, %v1383
    %v1385 = vsel %vm121, %v1383, %v1381
    %1386 = vst [vmem:[#allocation1] ss:$4 sm:$0xff] %v1218
    %v1387 = vld.sshfl [vmem:[#allocation1] sm:$0xff pattern:$0x73625140]
    %v1388 = vld.sshfl [vmem:[#allocation1 + $0x8] sm:$0xff pattern:$0x73625140]
    %1391 = vrot.lane.b32.xlu0 %v1387, 127
    %v1392 = vpop.permute.xlu0 %1391
    %1393 = vrot.lane.b32.xlu0 %v1388, 127
    %v1394 = vpop.permute.xlu0 %1393
    %v1395 = vsel %vm133, %v1392, %v1394
    %v1396 = vsel %vm133, %v1394, %v1392
    %v1397 = vsel %vm54, %v1385, %v1395
    %v1398 = vsel %vm55, %v1384, %v1396
    %v1399 = vadd.f32 %v1339, %v1349
    %v1400 = vadd.f32 %v1338, %v1350
    %v1401 = vadd.f32 %v1399, %v1373
    %v1402 = vadd.f32 %v1400, %v1374
    %v1403 = vadd.f32 %v1401, %v1397
    %v1404 = vadd.f32 %v1402, %v1398
    %v1405 = vmul.f32 %v1218, 4.0
    %1407 = vst [vmem:[#allocation1] ss:$4 sm:$0xff] %v1405
    %v1408 = vld.sshfl [vmem:[#allocation1] sm:$0xff pattern:$0x73625140]
    %v1409 = vld.sshfl [vmem:[#allocation1 + $0x8] sm:$0xff pattern:$0x73625140]
    %v1412 = vsub.f32 %v1403, %v1408
    %v1413 = vsub.f32 %v1404, %v1409
    %v1414 = vmul.f32 %v1412, 12.8
    %v1415 = vmul.f32 %v1413, 12.8
    %v1416 = vmul.f32 %v1210, 6.0
    %1418 = vst [vmem:[#allocation1] ss:$4 sm:$0xff] %v1416
    %v1419 = vld.sshfl [vmem:[#allocation1] sm:$0xff pattern:$0x73625140]
    %v1420 = vld.sshfl [vmem:[#allocation1 + $0x8] sm:$0xff pattern:$0x73625140]
    %v1423 = vadd.f32 %v1414, %v1419
    %v1424 = vadd.f32 %v1415, %v1420
    %1425 = vst [vmem:[#allocation1] ss:$4 sm:$0xff] %v1220
    %v1426 = vld.sshfl [vmem:[#allocation1] sm:$0xff pattern:$0x73625140]
    %v1427 = vld.sshfl [vmem:[#allocation1 + $0x8] sm:$0xff pattern:$0x73625140]
    %v1430 = vsub.f32 %v1423, %v1426
    %v1431 = vsub.f32 %v1424, %v1427
    %v1432 = vadd.f32 %v1097, %v1326
    %v1433 = vadd.f32 %v1098, %v1327
    %v1434 = vmul.f32 %v1432, 0.025
    %v1435 = vmul.f32 %v1433, 0.025
    %v1438 = vrot.slane %v1435, 6
    %v1439 = vsel %vm283, %v1434, %v1438
    %v1441 = vadd.f32 %v979, %v1439
    %v1442 = vadd.f32 %v1201, %v1430
    %v1443 = vadd.f32 %v1202, %v1431
    %v1444 = vmul.f32 %v1442, 0.025
    %v1445 = vmul.f32 %v1443, 0.025
    %v1448 = vrot.slane %v1445, 6
    %v1449 = vsel %vm283, %v1444, %v1448
    %v1451 = vadd.f32 %v989, %v1449
    %v1452 = vmul.f32 %v1441, %v1441
    %v1453 = vmul.f32 %v1452, %v1451
    %1455 = vst [vmem:[#allocation1] ss:$4 sm:$0xff] %v1441
    %v1456 = vld.sshfl [vmem:[#allocation1] sm:$0xff pattern:$0x73625140]
    %v1457 = vld.sshfl [vmem:[#allocation1 + $0x8] sm:$0xff pattern:$0x73625140]
    %1460 = vrot.lane.b32.xlu0 %v1456, 16
    %v1461 = vpop.permute.xlu0 %1460
    %1462 = vrot.lane.b32.xlu0 %v1457, 16
    %v1463 = vpop.permute.xlu0 %1462
    %v1464 = vsel %vm71, %v1461, %v1463
    %v1465 = vsel %vm71, %v1463, %v1461
    %1466 = vst [vmem:[#allocation1] ss:$4 sm:$0xff] %v1441
    %v1467 = vld.sshfl [vmem:[#allocation1] sm:$0xff pattern:$0x73625140]
    %v1468 = vld.sshfl [vmem:[#allocation1 + $0x8] sm:$0xff pattern:$0x73625140]
    %1471 = vrot.lane.b32.xlu0 %v1467, 112
    %v1472 = vpop.permute.xlu0 %1471
    %1473 = vrot.lane.b32.xlu0 %v1468, 112
    %v1474 = vpop.permute.xlu0 %1473
    %v1475 = vsel %vm83, %v1472, %v1474
    %v1476 = vsel %vm83, %v1474, %v1472
    %1477 = vst [vmem:[#allocation1] ss:$4 sm:$0xff] %v1441
    %v1478 = vld.sshfl [vmem:[#allocation1] sm:$0xff pattern:$0x73625140]
    %v1479 = vld.sshfl [vmem:[#allocation1 + $0x8] sm:$0xff pattern:$0x73625140]
    %1482 = vrot.lane.b32.xlu0 %v1478, 113
    %v1483 = vpop.permute.xlu0 %1482
    %1484 = vrot.lane.b32.xlu0 %v1479, 113
    %v1485 = vpop.permute.xlu0 %1484
    %v1486 = vsel %vm95, %v1483, %v1485
    %v1487 = vsel %vm95, %v1485, %v1483
    %1488 = vst [vmem:[#allocation1] ss:$4 sm:$0xff] %v1441
    %v1489 = vld.sshfl [vmem:[#allocation1] sm:$0xff pattern:$0x73625140]
    %v1490 = vld.sshfl [vmem:[#allocation1 + $0x8] sm:$0xff pattern:$0x73625140]
    %1493 = vrot.lane.b32.xlu0 %v1489, 1
    %v1494 = vpop.permute.xlu0 %1493
    %1495 = vrot.lane.b32.xlu0 %v1490, 1
    %v1496 = vpop.permute.xlu0 %1495
    %v1497 = vsel %vm107, %v1494, %v1496
    %v1498 = vsel %vm107, %v1496, %v1494
    %v1499 = vsel %vm52, %v1486, %v1498
    %v1500 = vsel %vm53, %v1487, %v1497
    %1501 = vst [vmem:[#allocation1] ss:$4 sm:$0xff] %v1441
    %v1502 = vld.sshfl [vmem:[#allocation1] sm:$0xff pattern:$0x73625140]
    %v1503 = vld.sshfl [vmem:[#allocation1 + $0x8] sm:$0xff pattern:$0x73625140]
    %1506 = vrot.lane.b32.xlu0 %v1502, 15
    %v1507 = vpop.permute.xlu0 %1506
    %1508 = vrot.lane.b32.xlu0 %v1503, 15
    %v1509 = vpop.permute.xlu0 %1508
    %v1510 = vsel %vm121, %v1507, %v1509
    %v1511 = vsel %vm121, %v1509, %v1507
    %1512 = vst [vmem:[#allocation1] ss:$4 sm:$0xff] %v1441
    %v1513 = vld.sshfl [vmem:[#allocation1] sm:$0xff pattern:$0x73625140]
    %v1514 = vld.sshfl [vmem:[#allocation1 + $0x8] sm:$0xff pattern:$0x73625140]
    %1517 = vrot.lane.b32.xlu0 %v1513, 127
    %v1518 = vpop.permute.xlu0 %1517
    %1519 = vrot.lane.b32.xlu0 %v1514, 127
    %v1520 = vpop.permute.xlu0 %1519
    %v1521 = vsel %vm133, %v1518, %v1520
    %v1522 = vsel %vm133, %v1520, %v1518
    %v1523 = vsel %vm54, %v1511, %v1521
    %v1524 = vsel %vm55, %v1510, %v1522
    %v1525 = vadd.f32 %v1465, %v1475
    %v1526 = vadd.f32 %v1464, %v1476
    %v1527 = vadd.f32 %v1525, %v1499
    %v1528 = vadd.f32 %v1526, %v1500
    %v1529 = vadd.f32 %v1527, %v1523
    %v1530 = vadd.f32 %v1528, %v1524
    %v1531 = vmul.f32 %v1441, 4.0
    %1533 = vst [vmem:[#allocation1] ss:$4 sm:$0xff] %v1531
    %v1534 = vld.sshfl [vmem:[#allocation1] sm:$0xff pattern:$0x73625140]
    %v1535 = vld.sshfl [vmem:[#allocation1 + $0x8] sm:$0xff pattern:$0x73625140]
    %v1538 = vsub.f32 %v1529, %v1534
    %v1539 = vsub.f32 %v1530, %v1535
    %v1540 = vmul.f32 %v1538, 2.56
    %v1541 = vmul.f32 %v1539, 2.56
    %v1542 = vadd.f32 %v1540, 3.0
    %v1543 = vadd.f32 %v1541, 3.0
    %v1544 = vmul.f32 %v1441, 7.0
    %1546 = vst [vmem:[#allocation1] ss:$4 sm:$0xff] %v1544
    %v1547 = vld.sshfl [vmem:[#allocation1] sm:$0xff pattern:$0x73625140]
    %v1548 = vld.sshfl [vmem:[#allocation1 + $0x8] sm:$0xff pattern:$0x73625140]
    %v1551 = vsub.f32 %v1542, %v1547
    %v1552 = vsub.f32 %v1543, %v1548
    %1554 = vst [vmem:[#allocation1] ss:$4 sm:$0xff] %v1453
    %v1555 = vld.sshfl [vmem:[#allocation1] sm:$0xff pattern:$0x73625140]
    %v1556 = vld.sshfl [vmem:[#allocation1 + $0x8] sm:$0xff pattern:$0x73625140]
    %v1559 = vadd.f32 %v1551, %v1555
    %v1560 = vadd.f32 %v1552, %v1556
    %1562 = vst [vmem:[#allocation1] ss:$4 sm:$0xff] %v1451
    %v1563 = vld.sshfl [vmem:[#allocation1] sm:$0xff pattern:$0x73625140]
    %v1564 = vld.sshfl [vmem:[#allocation1 + $0x8] sm:$0xff pattern:$0x73625140]
    %1567 = vrot.lane.b32.xlu0 %v1563, 16
    %v1568 = vpop.permute.xlu0 %1567
    %1569 = vrot.lane.b32.xlu0 %v1564, 16
    %v1570 = vpop.permute.xlu0 %1569
    %v1571 = vsel %vm71, %v1568, %v1570
    %v1572 = vsel %vm71, %v1570, %v1568
    %1573 = vst [vmem:[#allocation1] ss:$4 sm:$0xff] %v1451
    %v1574 = vld.sshfl [vmem:[#allocation1] sm:$0xff pattern:$0x73625140]
    %v1575 = vld.sshfl [vmem:[#allocation1 + $0x8] sm:$0xff pattern:$0x73625140]
    %1578 = vrot.lane.b32.xlu0 %v1574, 112
    %v1579 = vpop.permute.xlu0 %1578
    %1580 = vrot.lane.b32.xlu0 %v1575, 112
    %v1581 = vpop.permute.xlu0 %1580
    %v1582 = vsel %vm83, %v1579, %v1581
    %v1583 = vsel %vm83, %v1581, %v1579
    %1584 = vst [vmem:[#allocation1] ss:$4 sm:$0xff] %v1451
    %v1585 = vld.sshfl [vmem:[#allocation1] sm:$0xff pattern:$0x73625140]
    %v1586 = vld.sshfl [vmem:[#allocation1 + $0x8] sm:$0xff pattern:$0x73625140]
    %1589 = vrot.lane.b32.xlu0 %v1585, 113
    %v1590 = vpop.permute.xlu0 %1589
    %1591 = vrot.lane.b32.xlu0 %v1586, 113
    %v1592 = vpop.permute.xlu0 %1591
    %v1593 = vsel %vm95, %v1590, %v1592
    %v1594 = vsel %vm95, %v1592, %v1590
    %1595 = vst [vmem:[#allocation1] ss:$4 sm:$0xff] %v1451
    %v1596 = vld.sshfl [vmem:[#allocation1] sm:$0xff pattern:$0x73625140]
    %v1597 = vld.sshfl [vmem:[#allocation1 + $0x8] sm:$0xff pattern:$0x73625140]
    %1600 = vrot.lane.b32.xlu0 %v1596, 1
    %v1601 = vpop.permute.xlu0 %1600
    %1602 = vrot.lane.b32.xlu0 %v1597, 1
    %v1603 = vpop.permute.xlu0 %1602
    %v1604 = vsel %vm107, %v1601, %v1603
    %v1605 = vsel %vm107, %v1603, %v1601
    %v1606 = vsel %vm52, %v1593, %v1605
    %v1607 = vsel %vm53, %v1594, %v1604
    %1608 = vst [vmem:[#allocation1] ss:$4 sm:$0xff] %v1451
    %v1609 = vld.sshfl [vmem:[#allocation1] sm:$0xff pattern:$0x73625140]
    %v1610 = vld.sshfl [vmem:[#allocation1 + $0x8] sm:$0xff pattern:$0x73625140]
    %1613 = vrot.lane.b32.xlu0 %v1609, 15
    %v1614 = vpop.permute.xlu0 %1613
    %1615 = vrot.lane.b32.xlu0 %v1610, 15
    %v1616 = vpop.permute.xlu0 %1615
    %v1617 = vsel %vm121, %v1614, %v1616
    %v1618 = vsel %vm121, %v1616, %v1614
    %1619 = vst [vmem:[#allocation1] ss:$4 sm:$0xff] %v1451
    %v1620 = vld.sshfl [vmem:[#allocation1] sm:$0xff pattern:$0x73625140]
    %v1621 = vld.sshfl [vmem:[#allocation1 + $0x8] sm:$0xff pattern:$0x73625140]
    %1624 = vrot.lane.b32.xlu0 %v1620, 127
    %v1625 = vpop.permute.xlu0 %1624
    %1626 = vrot.lane.b32.xlu0 %v1621, 127
    %v1627 = vpop.permute.xlu0 %1626
    %v1628 = vsel %vm133, %v1625, %v1627
    %v1629 = vsel %vm133, %v1627, %v1625
    %v1630 = vsel %vm54, %v1618, %v1628
    %v1631 = vsel %vm55, %v1617, %v1629
    %v1632 = vadd.f32 %v1572, %v1582
    %v1633 = vadd.f32 %v1571, %v1583
    %v1634 = vadd.f32 %v1632, %v1606
    %v1635 = vadd.f32 %v1633, %v1607
    %v1636 = vadd.f32 %v1634, %v1630
    %v1637 = vadd.f32 %v1635, %v1631
    %v1638 = vmul.f32 %v1451, 4.0
    %1640 = vst [vmem:[#allocation1] ss:$4 sm:$0xff] %v1638
    %v1641 = vld.sshfl [vmem:[#allocation1] sm:$0xff pattern:$0x73625140]
    %v1642 = vld.sshfl [vmem:[#allocation1 + $0x8] sm:$0xff pattern:$0x73625140]
    %v1645 = vsub.f32 %v1636, %v1641
    %v1646 = vsub.f32 %v1637, %v1642
    %v1647 = vmul.f32 %v1645, 12.8
    %v1648 = vmul.f32 %v1646, 12.8
    %v1649 = vmul.f32 %v1441, 6.0
    %1651 = vst [vmem:[#allocation1] ss:$4 sm:$0xff] %v1649
    %v1652 = vld.sshfl [vmem:[#allocation1] sm:$0xff pattern:$0x73625140]
    %v1653 = vld.sshfl [vmem:[#allocation1 + $0x8] sm:$0xff pattern:$0x73625140]
    %v1656 = vadd.f32 %v1647, %v1652
    %v1657 = vadd.f32 %v1648, %v1653
    %1658 = vst [vmem:[#allocation1] ss:$4 sm:$0xff] %v1453
    %v1659 = vld.sshfl [vmem:[#allocation1] sm:$0xff pattern:$0x73625140]
    %v1660 = vld.sshfl [vmem:[#allocation1 + $0x8] sm:$0xff pattern:$0x73625140]
    %v1663 = vsub.f32 %v1656, %v1659
    %v1664 = vsub.f32 %v1657, %v1660
    %v1665 = vmul.f32 %v1559, 0.05
    %v1666 = vmul.f32 %v1560, 0.05
    %v1669 = vrot.slane %v1666, 6
    %v1670 = vsel %vm283, %v1665, %v1669
    %v1672 = vadd.f32 %v1441, %v1670
    %v1673 = vmul.f32 %v1663, 0.05
    %v1674 = vmul.f32 %v1664, 0.05
    %v1677 = vrot.slane %v1674, 6
    %v1678 = vsel %vm283, %v1673, %v1677
    %v1680 = vadd.f32 %v1451, %v1678
    %v1681 = vmul.f32 %v1672, %v1672
    %v1682 = vmul.f32 %v1681, %v1680
    %1684 = vst [vmem:[#allocation1] ss:$4 sm:$0xff] %v1672
    %v1685 = vld.sshfl [vmem:[#allocation1] sm:$0xff pattern:$0x73625140]
    %v1686 = vld.sshfl [vmem:[#allocation1 + $0x8] sm:$0xff pattern:$0x73625140]
    %1689 = vrot.lane.b32.xlu0 %v1685, 16
    %v1690 = vpop.permute.xlu0 %1689
    %1691 = vrot.lane.b32.xlu0 %v1686, 16
    %v1692 = vpop.permute.xlu0 %1691
    %v1693 = vsel %vm71, %v1690, %v1692
    %v1694 = vsel %vm71, %v1692, %v1690
    %1695 = vst [vmem:[#allocation1] ss:$4 sm:$0xff] %v1672
    %v1696 = vld.sshfl [vmem:[#allocation1] sm:$0xff pattern:$0x73625140]
    %v1697 = vld.sshfl [vmem:[#allocation1 + $0x8] sm:$0xff pattern:$0x73625140]
    %1700 = vrot.lane.b32.xlu0 %v1696, 112
    %v1701 = vpop.permute.xlu0 %1700
    %1702 = vrot.lane.b32.xlu0 %v1697, 112
    %v1703 = vpop.permute.xlu0 %1702
    %v1704 = vsel %vm83, %v1701, %v1703
    %v1705 = vsel %vm83, %v1703, %v1701
    %1706 = vst [vmem:[#allocation1] ss:$4 sm:$0xff] %v1672
    %v1707 = vld.sshfl [vmem:[#allocation1] sm:$0xff pattern:$0x73625140]
    %v1708 = vld.sshfl [vmem:[#allocation1 + $0x8] sm:$0xff pattern:$0x73625140]
    %1711 = vrot.lane.b32.xlu0 %v1707, 113
    %v1712 = vpop.permute.xlu0 %1711
    %1713 = vrot.lane.b32.xlu0 %v1708, 113
    %v1714 = vpop.permute.xlu0 %1713
    %v1715 = vsel %vm95, %v1712, %v1714
    %v1716 = vsel %vm95, %v1714, %v1712
    %1717 = vst [vmem:[#allocation1] ss:$4 sm:$0xff] %v1672
    %v1718 = vld.sshfl [vmem:[#allocation1] sm:$0xff pattern:$0x73625140]
    %v1719 = vld.sshfl [vmem:[#allocation1 + $0x8] sm:$0xff pattern:$0x73625140]
    %1722 = vrot.lane.b32.xlu0 %v1718, 1
    %v1723 = vpop.permute.xlu0 %1722
    %1724 = vrot.lane.b32.xlu0 %v1719, 1
    %v1725 = vpop.permute.xlu0 %1724
    %v1726 = vsel %vm107, %v1723, %v1725
    %v1727 = vsel %vm107, %v1725, %v1723
    %v1728 = vsel %vm52, %v1715, %v1727
    %v1729 = vsel %vm53, %v1716, %v1726
    %1730 = vst [vmem:[#allocation1] ss:$4 sm:$0xff] %v1672
    %v1731 = vld.sshfl [vmem:[#allocation1] sm:$0xff pattern:$0x73625140]
    %v1732 = vld.sshfl [vmem:[#allocation1 + $0x8] sm:$0xff pattern:$0x73625140]
    %1735 = vrot.lane.b32.xlu0 %v1731, 15
    %v1736 = vpop.permute.xlu0 %1735
    %1737 = vrot.lane.b32.xlu0 %v1732, 15
    %v1738 = vpop.permute.xlu0 %1737
    %v1739 = vsel %vm121, %v1736, %v1738
    %v1740 = vsel %vm121, %v1738, %v1736
    %1741 = vst [vmem:[#allocation1] ss:$4 sm:$0xff] %v1672
    %v1742 = vld.sshfl [vmem:[#allocation1] sm:$0xff pattern:$0x73625140]
    %v1743 = vld.sshfl [vmem:[#allocation1 + $0x8] sm:$0xff pattern:$0x73625140]
    %1746 = vrot.lane.b32.xlu0 %v1742, 127
    %v1747 = vpop.permute.xlu0 %1746
    %1748 = vrot.lane.b32.xlu0 %v1743, 127
    %v1749 = vpop.permute.xlu0 %1748
    %v1750 = vsel %vm133, %v1747, %v1749
    %v1751 = vsel %vm133, %v1749, %v1747
    %v1752 = vsel %vm54, %v1740, %v1750
    %v1753 = vsel %vm55, %v1739, %v1751
    %v1754 = vadd.f32 %v1694, %v1704
    %v1755 = vadd.f32 %v1693, %v1705
    %v1756 = vadd.f32 %v1754, %v1728
    %v1757 = vadd.f32 %v1755, %v1729
    %v1758 = vadd.f32 %v1756, %v1752
    %v1759 = vadd.f32 %v1757, %v1753
    %v1760 = vmul.f32 %v1672, 4.0
    %1762 = vst [vmem:[#allocation1] ss:$4 sm:$0xff] %v1760
    %v1763 = vld.sshfl [vmem:[#allocation1] sm:$0xff pattern:$0x73625140]
    %v1764 = vld.sshfl [vmem:[#allocation1 + $0x8] sm:$0xff pattern:$0x73625140]
    %v1767 = vsub.f32 %v1758, %v1763
    %v1768 = vsub.f32 %v1759, %v1764
    %v1769 = vmul.f32 %v1767, 2.56
    %v1770 = vmul.f32 %v1768, 2.56
    %v1771 = vadd.f32 %v1769, 3.0
    %v1772 = vadd.f32 %v1770, 3.0
    %v1773 = vmul.f32 %v1672, 7.0
    %1775 = vst [vmem:[#allocation1] ss:$4 sm:$0xff] %v1773
    %v1776 = vld.sshfl [vmem:[#allocation1] sm:$0xff pattern:$0x73625140]
    %v1777 = vld.sshfl [vmem:[#allocation1 + $0x8] sm:$0xff pattern:$0x73625140]
    %v1780 = vsub.f32 %v1771, %v1776
    %v1781 = vsub.f32 %v1772, %v1777
    %1783 = vst [vmem:[#allocation1] ss:$4 sm:$0xff] %v1682
    %v1784 = vld.sshfl [vmem:[#allocation1] sm:$0xff pattern:$0x73625140]
    %v1785 = vld.sshfl [vmem:[#allocation1 + $0x8] sm:$0xff pattern:$0x73625140]
    %v1788 = vadd.f32 %v1780, %v1784
    %v1789 = vadd.f32 %v1781, %v1785
    %1791 = vst [vmem:[#allocation1] ss:$4 sm:$0xff] %v1680
    %v1792 = vld.sshfl [vmem:[#allocation1] sm:$0xff pattern:$0x73625140]
    %v1793 = vld.sshfl [vmem:[#allocation1 + $0x8] sm:$0xff pattern:$0x73625140]
    %1796 = vrot.lane.b32.xlu0 %v1792, 16
    %v1797 = vpop.permute.xlu0 %1796
    %1798 = vrot.lane.b32.xlu0 %v1793, 16
    %v1799 = vpop.permute.xlu0 %1798
    %v1800 = vsel %vm71, %v1797, %v1799
    %v1801 = vsel %vm71, %v1799, %v1797
    %1802 = vst [vmem:[#allocation1] ss:$4 sm:$0xff] %v1680
    %v1803 = vld.sshfl [vmem:[#allocation1] sm:$0xff pattern:$0x73625140]
    %v1804 = vld.sshfl [vmem:[#allocation1 + $0x8] sm:$0xff pattern:$0x73625140]
    %1807 = vrot.lane.b32.xlu0 %v1803, 112
    %v1808 = vpop.permute.xlu0 %1807
    %1809 = vrot.lane.b32.xlu0 %v1804, 112
    %v1810 = vpop.permute.xlu0 %1809
    %v1811 = vsel %vm83, %v1808, %v1810
    %v1812 = vsel %vm83, %v1810, %v1808
    %1813 = vst [vmem:[#allocation1] ss:$4 sm:$0xff] %v1680
    %v1814 = vld.sshfl [vmem:[#allocation1] sm:$0xff pattern:$0x73625140]
    %v1815 = vld.sshfl [vmem:[#allocation1 + $0x8] sm:$0xff pattern:$0x73625140]
    %1818 = vrot.lane.b32.xlu0 %v1814, 113
    %v1819 = vpop.permute.xlu0 %1818
    %1820 = vrot.lane.b32.xlu0 %v1815, 113
    %v1821 = vpop.permute.xlu0 %1820
    %v1822 = vsel %vm95, %v1819, %v1821
    %v1823 = vsel %vm95, %v1821, %v1819
    %1824 = vst [vmem:[#allocation1] ss:$4 sm:$0xff] %v1680
    %v1825 = vld.sshfl [vmem:[#allocation1] sm:$0xff pattern:$0x73625140]
    %v1826 = vld.sshfl [vmem:[#allocation1 + $0x8] sm:$0xff pattern:$0x73625140]
    %1829 = vrot.lane.b32.xlu0 %v1825, 1
    %v1830 = vpop.permute.xlu0 %1829
    %1831 = vrot.lane.b32.xlu0 %v1826, 1
    %v1832 = vpop.permute.xlu0 %1831
    %v1833 = vsel %vm107, %v1830, %v1832
    %v1834 = vsel %vm107, %v1832, %v1830
    %v1835 = vsel %vm52, %v1822, %v1834
    %v1836 = vsel %vm53, %v1823, %v1833
    %1837 = vst [vmem:[#allocation1] ss:$4 sm:$0xff] %v1680
    %v1838 = vld.sshfl [vmem:[#allocation1] sm:$0xff pattern:$0x73625140]
    %v1839 = vld.sshfl [vmem:[#allocation1 + $0x8] sm:$0xff pattern:$0x73625140]
    %1842 = vrot.lane.b32.xlu0 %v1838, 15
    %v1843 = vpop.permute.xlu0 %1842
    %1844 = vrot.lane.b32.xlu0 %v1839, 15
    %v1845 = vpop.permute.xlu0 %1844
    %v1846 = vsel %vm121, %v1843, %v1845
    %v1847 = vsel %vm121, %v1845, %v1843
    %1848 = vst [vmem:[#allocation1] ss:$4 sm:$0xff] %v1680
    %v1849 = vld.sshfl [vmem:[#allocation1] sm:$0xff pattern:$0x73625140]
    %v1850 = vld.sshfl [vmem:[#allocation1 + $0x8] sm:$0xff pattern:$0x73625140]
    %1853 = vrot.lane.b32.xlu0 %v1849, 127
    %v1854 = vpop.permute.xlu0 %1853
    %1855 = vrot.lane.b32.xlu0 %v1850, 127
    %v1856 = vpop.permute.xlu0 %1855
    %v1857 = vsel %vm133, %v1854, %v1856
    %v1858 = vsel %vm133, %v1856, %v1854
    %v1859 = vsel %vm54, %v1847, %v1857
    %v1860 = vsel %vm55, %v1846, %v1858
    %v1861 = vadd.f32 %v1801, %v1811
    %v1862 = vadd.f32 %v1800, %v1812
    %v1863 = vadd.f32 %v1861, %v1835
    %v1864 = vadd.f32 %v1862, %v1836
    %v1865 = vadd.f32 %v1863, %v1859
    %v1866 = vadd.f32 %v1864, %v1860
    %v1867 = vmul.f32 %v1680, 4.0
    %1869 = vst [vmem:[#allocation1] ss:$4 sm:$0xff] %v1867
    %v1870 = vld.sshfl [vmem:[#allocation1] sm:$0xff pattern:$0x73625140]
    %v1871 = vld.sshfl [vmem:[#allocation1 + $0x8] sm:$0xff pattern:$0x73625140]
    %v1874 = vsub.f32 %v1865, %v1870
    %v1875 = vsub.f32 %v1866, %v1871
    %v1876 = vmul.f32 %v1874, 12.8
    %v1877 = vmul.f32 %v1875, 12.8
    %v1878 = vmul.f32 %v1672, 6.0
    %1880 = vst [vmem:[#allocation1] ss:$4 sm:$0xff] %v1878
    %v1881 = vld.sshfl [vmem:[#allocation1] sm:$0xff pattern:$0x73625140]
    %v1882 = vld.sshfl [vmem:[#allocation1 + $0x8] sm:$0xff pattern:$0x73625140]
    %v1885 = vadd.f32 %v1876, %v1881
    %v1886 = vadd.f32 %v1877, %v1882
    %1887 = vst [vmem:[#allocation1] ss:$4 sm:$0xff] %v1682
    %v1888 = vld.sshfl [vmem:[#allocation1] sm:$0xff pattern:$0x73625140]
    %v1889 = vld.sshfl [vmem:[#allocation1 + $0x8] sm:$0xff pattern:$0x73625140]
    %v1892 = vsub.f32 %v1885, %v1888
    %v1893 = vsub.f32 %v1886, %v1889
    %v1894 = vadd.f32 %v1559, %v1788
    %v1895 = vadd.f32 %v1560, %v1789
    %v1896 = vmul.f32 %v1894, 0.025
    %v1897 = vmul.f32 %v1895, 0.025
    %v1900 = vrot.slane %v1897, 6
    %v1901 = vsel %vm283, %v1896, %v1900
    %v1903 = vadd.f32 %v1441, %v1901
    %v1904 = vadd.f32 %v1663, %v1892
    %v1905 = vadd.f32 %v1664, %v1893
    %v1906 = vmul.f32 %v1904, 0.025
    %v1907 = vmul.f32 %v1905, 0.025
    %v1910 = vrot.slane %v1907, 6
    %v1911 = vsel %vm283, %v1906, %v1910
    %v1913 = vadd.f32 %v1451, %v1911
    %1914 = vst [vmem:[#allocation5] sm:$0xf] %v1903
    %s1915 = scalar_lea.vmem [#allocation5], 4
    %1916 = vst [vmem:[%s1915] sm:$0xf] %v1913
    // Predicated region
    $region10: #{tpu_custom_call.1} parent=1 // pred_check
      _
    $region11: #{tpu_custom_call.1} parent=1 // pred_check_branch
      %1918 = sbr.rel (0) target = $region13
    $region12: #{tpu_custom_call.1} parent=1 // pred_region
      %1920 = vsyncadd [#allocation4], 0
      %s1921 = sshll.u32 [#allocation5], 4
      %s1922 = int_to_ptr.vmem [resolvable:$true] %s1921
      %s1923 = sshll.u32 %s1, 4
      %s1924 = int_to_ptr.hbm [resolvable:$true] %s1923
      %1929 = dma.vmem_to_hbm [thread:$0]  %s1922, 128, %s1924, [#allocation4], 64, 64, 4
    $region13: #{tpu_custom_call.1} parent=1 // pred_fallthru
      _
    // Predicated region
    $region14: #{tpu_custom_call.1} parent=1 // pred_check
      _
    $region15: #{tpu_custom_call.1} parent=1 // pred_check_branch
      %1931 = sbr.rel (0) target = $region17
    $region16: #{tpu_custom_call.1} parent=1 // pred_region
      %1933 = dma.done [#allocation4], 128
    $region17: #{tpu_custom_call.1} parent=1 // pred_fallthru
      _
    %1934 = vsyncpa [#allocation3], 1
    %1935 = vsyncpa [#allocation4], 1

</llo_original>
